<compile_context>
chip_gen: v7x
topology: tpu7x:2x2x1
jax: 0.10.0
libtpu: 0.0.40
codegen_flags: <defaults>
</compile_context>

<pallas_src>
import math
from functools import partial

import jax
import jax.numpy as jnp
from jax.experimental import pallas as pl
from jax.experimental.pallas import tpu as pltpu

H_PAD = 128          # lane-dense padded feature width (multiple of 128)
BN_EPS = 1e-5


# --------------------------------------------------------------------------- #
#  Pallas kernel: one SAGEConv layer (mean aggregation + root term + L2 norm)  #
# --------------------------------------------------------------------------- #
def _sage_layer_kernel(a_ref, nbr_ref, inv_deg_ref, root_ref, out_ref, acc_ref,
                       *, apply_relu):
    """Grid = (row blocks of A : "parallel", K/column blocks of A : "arbitrary").

    a_ref       : (tm, tk) int8  integer edge counts (A[dst, src])
    nbr_ref     : (tk, H)  f32   neighbor features already transformed by W_l
    inv_deg_ref : (tm, 1)  f32   1 / max(in_degree, 1)  (exact mean scaling)
    root_ref    : (tm, H)  f32   lin_r(x) + lin_l bias  (precomputed)
    out_ref     : (tm, H)
    acc_ref     : (tm, H)  f32   VMEM scratch accumulator (lives across K steps)
    """
    k = pl.program_id(1)

    @pl.when(k == 0)
    def _():
        acc_ref[...] = jnp.zeros_like(acc_ref)

    # Cast the int8 counts on the VPU; accumulate on the MXU in f32.
    a = a_ref[...].astype(jnp.float32)
    acc_ref[...] += jnp.dot(a, nbr_ref[...].astype(jnp.float32),
                            preferred_element_type=jnp.float32)

    @pl.when(k == pl.num_programs(1) - 1)
    def _():
        # sum_j count_ij * nbr_j  ->  exact mean via f32 inv_deg, then root term.
        y = acc_ref[...] * inv_deg_ref[...] + root_ref[...]
        # normalize=True: F.normalize(y, 2, -1) == y / max(||y||, 1e-12).
        ss = jnp.sum(y * y, axis=-1, keepdims=True)
        y = y * jax.lax.rsqrt(jnp.maximum(ss, 1e-24))   # EUP rsqrt, no VPU divide
        if apply_relu:
            y = jnp.maximum(y, 0.0)
        out_ref[...] = y.astype(out_ref.dtype)
        # TODO(synk): training-mode dropout would use pltpu.prng_seed +
        # pltpu.stateful_bernoulli here; eval mode is the identity.


def _round_up(x, m):
    return ((x + m - 1) // m) * m


def _pad_and_tiles(n):
    """Pad N to a tile multiple (never a single giant (N,N) block) and pick tiles.

    Targets tm=256 rows / tk=2048 columns per grid step so each step moves a few
    MiB; per-step VMEM: A 2x(tm*tk)i8 + nbr 2x(tk*128)f32 + root/out/acc tiles
    ~= 4 MiB, well inside every generation's scoped VMEM.
    """
    tm_target, tk_target = 256, 2048
    n_pad = _round_up(n, tm_target)
    if n_pad <= tk_target:
        tk = n_pad                      # small graphs: single K block
    else:
        n_pad = _round_up(n_pad, tk_target)
        tk = tk_target
    tm = tm_target                      # divides n_pad in both branches
    return n_pad, tm, tk


def sage_layer(a_cnt, nbr, inv_deg, root, *, tm, tk, apply_relu,
               out_dtype=jnp.float32):
    n_pad = a_cnt.shape[0]
    h = nbr.shape[1]
    grid = (n_pad // tm, n_pad // tk)   # (row blocks, K blocks)
    return pl.pallas_call(
        partial(_sage_layer_kernel, apply_relu=apply_relu),
        out_shape=jax.ShapeDtypeStruct((n_pad, h), out_dtype),
        grid=grid,
        in_specs=[
            pl.BlockSpec((tm, tk), lambda i, k: (i, k)),   # A row/col tile (int8)
            pl.BlockSpec((tk, h), lambda i, k: (k, 0)),    # nbr tile along K
            pl.BlockSpec((tm, 1), lambda i, k: (i, 0)),    # inv in-degree (rows)
            pl.BlockSpec((tm, h), lambda i, k: (i, 0)),    # root/self term (rows)
        ],
        out_specs=pl.BlockSpec((tm, h), lambda i, k: (i, 0)),
        scratch_shapes=[pltpu.VMEM((tm, h), jnp.float32)],
        compiler_params=pltpu.CompilerParams(
            # Row axis parallel (megacore on v7x), K axis is the reduction.
            dimension_semantics=("parallel", "arbitrary"),
            # ~4 MiB footprint -> 32 MiB is safe headroom on v5e/v6e/v7x alike.
            vmem_limit_bytes=32 * 1024 * 1024,
        ),
    )(a_cnt, nbr, inv_deg, root)


# --------------------------------------------------------------------------- #
#  Graph / parameter preparation (XLA)                                          #
# --------------------------------------------------------------------------- #
def build_adjacency(edge_index, n_pad):
    """int8 count adjacency A[dst, src] = edge multiplicity, plus f32 1/in_degree.

    Storing exact integer counts (not 1/deg weights) keeps the aggregation exact
    in any narrow dtype; the mean scaling happens in f32 inside the kernel.
    """
    src, dst = edge_index[0], edge_index[1]
    ones_i = jnp.ones(src.shape[0], jnp.int32)
    a_cnt = (jnp.zeros((n_pad, n_pad), jnp.int32)
             .at[dst, src].add(ones_i).astype(jnp.int8))   # counts < 128 assumed
    deg = jnp.zeros((n_pad,), jnp.float32).at[dst].add(1.0)
    inv_deg = (1.0 / jnp.maximum(deg, 1.0)).reshape(n_pad, 1)
    return a_cnt, inv_deg


def sage_encoder_forward(x, edge_index, params, *,
                         nbr_dtype=jnp.float32, inter_dtype=jnp.float32):
    """Full SAGE_encoder forward (eval mode). Returns (N, H_PAD) lane-padded output.

    At scale set nbr_dtype / inter_dtype to bf16 to halve the remaining feature
    traffic; f32 defaults keep the small self-test bit-tight.
    """
    wl1, wr1, b1, wl2, wr2, b2, bn_scale, bn_shift = params
    n = x.shape[0]
    n_pad, tm, tk = _pad_and_tiles(n)

    a_cnt, inv_deg = build_adjacency(edge_index, n_pad)
    x_pad = jnp.pad(x, ((0, n_pad - n), (0, 0)))

    # ---- layer 1 (tiny K=num_features linears hoisted to XLA) ----
    nbr1 = (x_pad @ wl1).astype(nbr_dtype)      # lin_l weight applied pre-aggregation
    root1 = x_pad @ wr1 + b1                    # lin_r(x) + lin_l bias
    t = sage_layer(a_cnt, nbr1, inv_deg, root1, tm=tm, tk=tk,
                   apply_relu=True, out_dtype=inter_dtype)

    # ---- transition BatchNorm1d (eval affine) folded exactly into layer 2 ----
    # bn(u) = u*scale + shift, so bn(u) @ W = u @ (diag(scale) @ W) + shift @ W.
    # Folding the shift into the per-row neighbor features (not the output bias)
    # keeps in-degree-0 nodes exact: their aggregated term stays 0.
    wl2_s = bn_scale[0][:, None] * wl2
    wr2_s = bn_scale[0][:, None] * wr2
    c_l = bn_shift @ wl2                        # (1, H_PAD), padded lanes stay 0
    c_r = bn_shift @ wr2 + b2

    t_f32 = t.astype(jnp.float32)
    nbr2 = (t_f32 @ wl2_s + c_l).astype(nbr_dtype)
    root2 = t_f32 @ wr2_s + c_r
    h = sage_layer(a_cnt, nbr2, inv_deg, root2, tm=tm, tk=tk,
                   apply_relu=False, out_dtype=jnp.float32)
    return h[:n]


# --------------------------------------------------------------------------- #
#  Self-test                                                                    #
# --------------------------------------------------------------------------- #
def glorot(key, shape):
    fan_in, fan_out = shape
    limit = math.sqrt(6.0 / (fan_in + fan_out))
    return jax.random.uniform(key, shape, jnp.float32, -limit, limit)


def pad2(a, rows, cols):
    return jnp.pad(a, ((0, rows - a.shape[0]), (0, cols - a.shape[1])))


if __name__ == "__main__":
    # args: num_features=8, hidden=32, dropout=0.5 (eval mode)
    N, IN_DIM, HIDDEN, NUM_EDGES = 16, 8, 32, 40

    key = jax.random.PRNGKey(0)
    k_x, k_e, k1, k2, k3, k4 = jax.random.split(key, 6)

    x = jax.random.normal(k_x, (N, IN_DIM), jnp.float32)
    edge_index = jax.random.randint(k_e, (2, NUM_EDGES), 0, N, jnp.int32)

    # Real (unpadded) parameters: SAGEConv lin_l (bias) / lin_r (no bias) per layer.
    wl1_r = glorot(k1, (IN_DIM, HIDDEN))
    wr1_r = glorot(k2, (IN_DIM, HIDDEN))
    b1_r = jnp.zeros((HIDDEN,), jnp.float32)
    wl2_r = glorot(k3, (HIDDEN, HIDDEN))
    wr2_r = glorot(k4, (HIDDEN, HIDDEN))
    b2_r = jnp.zeros((HIDDEN,), jnp.float32)

    # BatchNorm1d eval mode with default running stats (mean=0, var=1, gamma=1, beta=0).
    bn_scale_val = 1.0 / math.sqrt(1.0 + BN_EPS)
    bn_shift_val = 0.0

    # Lane-dense padding of feature dims to 128; padded columns stay exactly zero
    # end-to-end so the in-kernel L2 norm over 128 lanes equals the norm over 32.
    params = (
        pad2(wl1_r, IN_DIM, H_PAD),
        pad2(wr1_r, IN_DIM, H_PAD),
        jnp.zeros((1, H_PAD), jnp.float32).at[0, :HIDDEN].set(b1_r),
        pad2(wl2_r, H_PAD, H_PAD),
        pad2(wr2_r, H_PAD, H_PAD),
        jnp.zeros((1, H_PAD), jnp.float32).at[0, :HIDDEN].set(b2_r),
        jnp.full((1, H_PAD), bn_scale_val, jnp.float32),
        jnp.zeros((1, H_PAD), jnp.float32),
    )

    out = jax.jit(sage_encoder_forward)(x, edge_index, params)
    out = jax.block_until_ready(out)[:, :HIDDEN]

    # ---- Pure-JAX reference (unpadded, original module semantics) ----
    src, dst = edge_index[0], edge_index[1]
    ones = jnp.ones(src.shape[0], jnp.float32)
    a_full = jnp.zeros((N, N), jnp.float32).at[dst, src].add(ones)
    deg = jnp.zeros((N,), jnp.float32).at[dst].add(ones)
    a_mean = a_full / jnp.maximum(deg, 1.0)[:, None]

    y1 = (a_mean @ x) @ wl1_r + b1_r + x @ wr1_r
    y1 = y1 / jnp.maximum(jnp.linalg.norm(y1, axis=-1, keepdims=True), 1e-12)
    t_ref = jnp.maximum(y1, 0.0) * bn_scale_val + bn_shift_val
    y2 = (a_mean @ t_ref) @ wl2_r + b2_r + t_ref @ wr2_r
    y2 = y2 / jnp.maximum(jnp.linalg.norm(y2, axis=-1, keepdims=True), 1e-12)

    assert out.shape == (N, HIDDEN)
    assert jnp.allclose(out, y2, atol=1e-4, rtol=1e-4), (
        float(jnp.max(jnp.abs(out - y2))))

    print("KERNEL_OK")
</pallas_src>

<mosaic_0001>
module attributes {stable_mosaic.version = 11 : i64} {
  func.func @_sage_layer_kernel(%arg0: i32, %arg1: i32, %arg2: memref<256x256xi8, #tpu.memory_space<vmem>>, %arg3: memref<256x128xf32, #tpu.memory_space<vmem>>, %arg4: memref<256x1xf32, #tpu.memory_space<vmem>>, %arg5: memref<256x128xf32, #tpu.memory_space<vmem>>, %arg6: memref<256x128xf32, #tpu.memory_space<vmem>>, %arg7: memref<256x128xf32, #tpu.memory_space<vmem>>) attributes {dimension_semantics = [#tpu.dimension_semantics<parallel>, #tpu.dimension_semantics<arbitrary>], iteration_bounds = array<i64: 1, 1>, scalar_prefetch = 0 : i64, scratch_operands = 1 : i64, tpu.core_type = #tpu.core_type<tc>, window_params = [{transform_indices = @transform_0, window_bounds = array<i64: 256, 256>}, {transform_indices = @transform_1, window_bounds = array<i64: 256, 128>}, {transform_indices = @transform_2, window_bounds = array<i64: 256, 1>}, {transform_indices = @transform_3, window_bounds = array<i64: 256, 128>}, {transform_indices = @transform_4, window_bounds = array<i64: 256, 128>}]} {
    %c0_i32 = arith.constant 0 : i32
    %0 = arith.cmpi eq, %arg1, %c0_i32 : i32
    %1 = arith.extui %0 : i1 to i32
    %c0_i32_0 = arith.constant 0 : i32
    %2 = arith.cmpi ne, %1, %c0_i32_0 : i32
    scf.if %2 {
      %cst_10 = arith.constant 0.000000e+00 : f32
      %13 = vector.broadcast %cst_10 : f32 to vector<256x128xf32>
      %c0_11 = arith.constant 0 : index
      %c0_12 = arith.constant 0 : index
      %14 = vector.load %arg7[%c0_11, %c0_12] : memref<256x128xf32, #tpu.memory_space<vmem>>, vector<256x128xf32>
      tpu.vector_store %arg7[%c0_11, %c0_12], %13 {strides = array<i32>} : memref<256x128xf32, #tpu.memory_space<vmem>>, vector<256x128xf32>,
    } else {
    }
    %c0 = arith.constant 0 : index
    %c0_1 = arith.constant 0 : index
    %3 = vector.load %arg2[%c0, %c0_1] : memref<256x256xi8, #tpu.memory_space<vmem>>, vector<256x256xi8>
    %4 = arith.sitofp %3 : vector<256x256xi8> to vector<256x256xf32>
    %c0_2 = arith.constant 0 : index
    %c0_3 = arith.constant 0 : index
    %5 = vector.load %arg7[%c0_2, %c0_3] : memref<256x128xf32, #tpu.memory_space<vmem>>, vector<256x128xf32>
    %c0_4 = arith.constant 0 : index
    %c0_5 = arith.constant 0 : index
    %6 = vector.load %arg3[%c0_4, %c0_5] : memref<256x128xf32, #tpu.memory_space<vmem>>, vector<256x128xf32>
    %cst = arith.constant dense<0.000000e+00> : vector<256x128xf32>
    %7 = tpu.matmul %4, %6, %cst {dimension_numbers = #tpu.dot_dimension_numbers<[1], [0], [0], [1], [0, 0, 1, 1], [], []>} : vector<256x256xf32>, vector<256x128xf32>, vector<256x128xf32> -> vector<256x128xf32>
    %8 = arith.addf %5, %7 : vector<256x128xf32>
    %c0_6 = arith.constant 0 : index
    %c0_7 = arith.constant 0 : index
    %9 = vector.load %arg7[%c0_6, %c0_7] : memref<256x128xf32, #tpu.memory_space<vmem>>, vector<256x128xf32>
    tpu.vector_store %arg7[%c0_6, %c0_7], %8 {strides = array<i32>} : memref<256x128xf32, #tpu.memory_space<vmem>>, vector<256x128xf32>,
    %c0_i32_8 = arith.constant 0 : i32
    %10 = arith.cmpi eq, %arg1, %c0_i32_8 : i32
    %11 = arith.extui %10 : i1 to i32
    %c0_i32_9 = arith.constant 0 : i32
    %12 = arith.cmpi ne, %11, %c0_i32_9 : i32
    scf.if %12 {
      %c0_10 = arith.constant 0 : index
      %c0_11 = arith.constant 0 : index
      %13 = vector.load %arg7[%c0_10, %c0_11] : memref<256x128xf32, #tpu.memory_space<vmem>>, vector<256x128xf32>
      %c0_12 = arith.constant 0 : index
      %c0_13 = arith.constant 0 : index
      %14 = vector.load %arg4[%c0_12, %c0_13] : memref<256x1xf32, #tpu.memory_space<vmem>>, vector<256x1xf32>
      %15 = vector.broadcast %14 : vector<256x1xf32> to vector<256x128xf32>
      %16 = arith.mulf %13, %15 : vector<256x128xf32>
      %c0_14 = arith.constant 0 : index
      %c0_15 = arith.constant 0 : index
      %17 = vector.load %arg5[%c0_14, %c0_15] : memref<256x128xf32, #tpu.memory_space<vmem>>, vector<256x128xf32>
      %18 = arith.addf %16, %17 : vector<256x128xf32>
      %19 = arith.mulf %18, %18 : vector<256x128xf32>
      %cst_16 = arith.constant dense<0.000000e+00> : vector<256xf32>
      %20 = vector.multi_reduction <add>, %19, %cst_16 [1] : vector<256x128xf32> to vector<256xf32>
      %21 = vector.shape_cast %20 : vector<256xf32> to vector<256x1xf32>
      %cst_17 = arith.constant 1.000000e-24 : f32
      %22 = vector.broadcast %cst_17 : f32 to vector<256x1xf32>
      %23 = arith.maximumf %21, %22 : vector<256x1xf32>
      %24 = math.rsqrt %23 : vector<256x1xf32>
      %25 = vector.broadcast %24 : vector<256x1xf32> to vector<256x128xf32>
      %26 = arith.mulf %18, %25 : vector<256x128xf32>
      %cst_18 = arith.constant 0.000000e+00 : f32
      %27 = vector.broadcast %cst_18 : f32 to vector<256x128xf32>
      %28 = arith.maximumf %26, %27 : vector<256x128xf32>
      %c0_19 = arith.constant 0 : index
      %c0_20 = arith.constant 0 : index
      %29 = vector.load %arg6[%c0_19, %c0_20] : memref<256x128xf32, #tpu.memory_space<vmem>>, vector<256x128xf32>
      tpu.vector_store %arg6[%c0_19, %c0_20], %28 {strides = array<i32>} : memref<256x128xf32, #tpu.memory_space<vmem>>, vector<256x128xf32>,
    } else {
    }
    return
  }
  func.func @transform_0(%arg0: i32, %arg1: i32) -> (i32, i32) {
    %c0_i32 = arith.constant 0 : i32
    return %arg0, %arg1 : i32, i32
  }
  func.func @transform_1(%arg0: i32, %arg1: i32) -> (i32, i32) {
    %c0_i32 = arith.constant 0 : i32
    %c0_i32_0 = arith.constant 0 : i32
    return %arg1, %c0_i32 : i32, i32
  }
  func.func @transform_2(%arg0: i32, %arg1: i32) -> (i32, i32) {
    %c0_i32 = arith.constant 0 : i32
    %c0_i32_0 = arith.constant 0 : i32
    return %arg0, %c0_i32 : i32, i32
  }
  func.func @transform_3(%arg0: i32, %arg1: i32) -> (i32, i32) {
    %c0_i32 = arith.constant 0 : i32
    %c0_i32_0 = arith.constant 0 : i32
    return %arg0, %c0_i32 : i32, i32
  }
  func.func @transform_4(%arg0: i32, %arg1: i32) -> (i32, i32) {
    %c0_i32 = arith.constant 0 : i32
    %c0_i32_0 = arith.constant 0 : i32
    return %arg0, %c0_i32 : i32, i32
  }
}

module attributes {stable_mosaic.version = 11 : i64} {
  func.func @_sage_layer_kernel(%arg0: i32, %arg1: i32, %arg2: memref<256x256xi8, #tpu.memory_space<vmem>>, %arg3: memref<256x128xf32, #tpu.memory_space<vmem>>, %arg4: memref<256x1xf32, #tpu.memory_space<vmem>>, %arg5: memref<256x128xf32, #tpu.memory_space<vmem>>, %arg6: memref<256x128xf32, #tpu.memory_space<vmem>>, %arg7: memref<256x128xf32, #tpu.memory_space<vmem>>) attributes {dimension_semantics = [#tpu.dimension_semantics<parallel>, #tpu.dimension_semantics<arbitrary>], iteration_bounds = array<i64: 1, 1>, scalar_prefetch = 0 : i64, scratch_operands = 1 : i64, tpu.core_type = #tpu.core_type<tc>, window_params = [{transform_indices = @transform_0, window_bounds = array<i64: 256, 256>}, {transform_indices = @transform_1, window_bounds = array<i64: 256, 128>}, {transform_indices = @transform_2, window_bounds = array<i64: 256, 1>}, {transform_indices = @transform_3, window_bounds = array<i64: 256, 128>}, {transform_indices = @transform_4, window_bounds = array<i64: 256, 128>}]} {
    %c0_i32 = arith.constant 0 : i32
    %0 = arith.cmpi eq, %arg1, %c0_i32 : i32
    %1 = arith.extui %0 : i1 to i32
    %c0_i32_0 = arith.constant 0 : i32
    %2 = arith.cmpi ne, %1, %c0_i32_0 : i32
    scf.if %2 {
      %cst_10 = arith.constant 0.000000e+00 : f32
      %13 = vector.broadcast %cst_10 : f32 to vector<256x128xf32>
      %c0_11 = arith.constant 0 : index
      %c0_12 = arith.constant 0 : index
      %14 = vector.load %arg7[%c0_11, %c0_12] : memref<256x128xf32, #tpu.memory_space<vmem>>, vector<256x128xf32>
      tpu.vector_store %arg7[%c0_11, %c0_12], %13 {strides = array<i32>} : memref<256x128xf32, #tpu.memory_space<vmem>>, vector<256x128xf32>,
    } else {
    }
    %c0 = arith.constant 0 : index
    %c0_1 = arith.constant 0 : index
    %3 = vector.load %arg2[%c0, %c0_1] : memref<256x256xi8, #tpu.memory_space<vmem>>, vector<256x256xi8>
    %4 = arith.sitofp %3 : vector<256x256xi8> to vector<256x256xf32>
    %c0_2 = arith.constant 0 : index
    %c0_3 = arith.constant 0 : index
    %5 = vector.load %arg7[%c0_2, %c0_3] : memref<256x128xf32, #tpu.memory_space<vmem>>, vector<256x128xf32>
    %c0_4 = arith.constant 0 : index
    %c0_5 = arith.constant 0 : index
    %6 = vector.load %arg3[%c0_4, %c0_5] : memref<256x128xf32, #tpu.memory_space<vmem>>, vector<256x128xf32>
    %cst = arith.constant dense<0.000000e+00> : vector<256x128xf32>
    %7 = tpu.matmul %4, %6, %cst {dimension_numbers = #tpu.dot_dimension_numbers<[1], [0], [0], [1], [0, 0, 1, 1], [], []>} : vector<256x256xf32>, vector<256x128xf32>, vector<256x128xf32> -> vector<256x128xf32>
    %8 = arith.addf %5, %7 : vector<256x128xf32>
    %c0_6 = arith.constant 0 : index
    %c0_7 = arith.constant 0 : index
    %9 = vector.load %arg7[%c0_6, %c0_7] : memref<256x128xf32, #tpu.memory_space<vmem>>, vector<256x128xf32>
    tpu.vector_store %arg7[%c0_6, %c0_7], %8 {strides = array<i32>} : memref<256x128xf32, #tpu.memory_space<vmem>>, vector<256x128xf32>,
    %c0_i32_8 = arith.constant 0 : i32
    %10 = arith.cmpi eq, %arg1, %c0_i32_8 : i32
    %11 = arith.extui %10 : i1 to i32
    %c0_i32_9 = arith.constant 0 : i32
    %12 = arith.cmpi ne, %11, %c0_i32_9 : i32
    scf.if %12 {
      %c0_10 = arith.constant 0 : index
      %c0_11 = arith.constant 0 : index
      %13 = vector.load %arg7[%c0_10, %c0_11] : memref<256x128xf32, #tpu.memory_space<vmem>>, vector<256x128xf32>
      %c0_12 = arith.constant 0 : index
      %c0_13 = arith.constant 0 : index
      %14 = vector.load %arg4[%c0_12, %c0_13] : memref<256x1xf32, #tpu.memory_space<vmem>>, vector<256x1xf32>
      %15 = vector.broadcast %14 : vector<256x1xf32> to vector<256x128xf32>
      %16 = arith.mulf %13, %15 : vector<256x128xf32>
      %c0_14 = arith.constant 0 : index
      %c0_15 = arith.constant 0 : index
      %17 = vector.load %arg5[%c0_14, %c0_15] : memref<256x128xf32, #tpu.memory_space<vmem>>, vector<256x128xf32>
      %18 = arith.addf %16, %17 : vector<256x128xf32>
      %19 = arith.mulf %18, %18 : vector<256x128xf32>
      %cst_16 = arith.constant dense<0.000000e+00> : vector<256xf32>
      %20 = vector.multi_reduction <add>, %19, %cst_16 [1] : vector<256x128xf32> to vector<256xf32>
      %21 = vector.shape_cast %20 : vector<256xf32> to vector<256x1xf32>
      %cst_17 = arith.constant 1.000000e-24 : f32
      %22 = vector.broadcast %cst_17 : f32 to vector<256x1xf32>
      %23 = arith.maximumf %21, %22 : vector<256x1xf32>
      %24 = math.rsqrt %23 : vector<256x1xf32>
      %25 = vector.broadcast %24 : vector<256x1xf32> to vector<256x128xf32>
      %26 = arith.mulf %18, %25 : vector<256x128xf32>
      %c0_18 = arith.constant 0 : index
      %c0_19 = arith.constant 0 : index
      %27 = vector.load %arg6[%c0_18, %c0_19] : memref<256x128xf32, #tpu.memory_space<vmem>>, vector<256x128xf32>
      tpu.vector_store %arg6[%c0_18, %c0_19], %26 {strides = array<i32>} : memref<256x128xf32, #tpu.memory_space<vmem>>, vector<256x128xf32>,
    } else {
    }
    return
  }
  func.func @transform_0(%arg0: i32, %arg1: i32) -> (i32, i32) {
    %c0_i32 = arith.constant 0 : i32
    return %arg0, %arg1 : i32, i32
  }
  func.func @transform_1(%arg0: i32, %arg1: i32) -> (i32, i32) {
    %c0_i32 = arith.constant 0 : i32
    %c0_i32_0 = arith.constant 0 : i32
    return %arg1, %c0_i32 : i32, i32
  }
  func.func @transform_2(%arg0: i32, %arg1: i32) -> (i32, i32) {
    %c0_i32 = arith.constant 0 : i32
    %c0_i32_0 = arith.constant 0 : i32
    return %arg0, %c0_i32 : i32, i32
  }
  func.func @transform_3(%arg0: i32, %arg1: i32) -> (i32, i32) {
    %c0_i32 = arith.constant 0 : i32
    %c0_i32_0 = arith.constant 0 : i32
    return %arg0, %c0_i32 : i32, i32
  }
  func.func @transform_4(%arg0: i32, %arg1: i32) -> (i32, i32) {
    %c0_i32 = arith.constant 0 : i32
    %c0_i32_0 = arith.constant 0 : i32
    return %arg0, %c0_i32 : i32, i32
  }
}

</mosaic_0001>

<llo_original>
// kernel: sage_encoder_forward.3
$region0: #{sage_encoder_forward.3}
  #allocation0 [shape = 'u32[]', space=smem, size = 0x4, offset = 0x4, fixed_abs, tag = 'smem constant byte address 0x4 - core index']
  #allocation1 [shape = 'u32[144,128]{1,0:T(1,128)}', space=vmem, size = 0x12000, scoped, tag = 'internal scratch']
  #allocation2 [shape = 'f32[256,128]{1,0:T(8,128)}', space=vmem, size = 0x20000, scoped, tag = 'scratch operand']
  %s0 = inlined_call_operand.vmem [shape: s8[256,256], index: 0, kind: input, shape index: {}]
  %s1 = inlined_call_operand.vmem [shape: f32[256,128], index: 1, kind: input, shape index: {}]
  %s2 = inlined_call_operand.vmem [shape: f32[256,1], index: 2, kind: input, shape index: {}]
  %s3 = inlined_call_operand.vmem [shape: f32[256,128], index: 3, kind: input, shape index: {}]
  %s4 = inlined_call_operand.vmem [shape: f32[256,128], index: 4, kind: output, shape index: {}]
  %s5 = sld [smem:[#allocation0]]
  $region34: #{sage_encoder_forward.3} parent=0
    _
  %s7 = ssub.s32 1, %s5
  %s8 = scalar_select 0, %s7, %s5
  // Predicated region
  $region2: #{sage_encoder_forward.3} parent=0 // pred_check
    _
  $region3: #{sage_encoder_forward.3} parent=0 // pred_check_branch
    %10 = sbr.rel (0) target = $region5
  $region4: #{sage_encoder_forward.3} parent=0 // pred_region
    _
  $region5: #{sage_encoder_forward.3} parent=0 // pred_fallthru
    _
  // Predicated region
  $region6: #{sage_encoder_forward.3} parent=0 // pred_check
    _
  $region7: #{sage_encoder_forward.3} parent=0 // pred_check_branch
    %12 = sbr.rel (0) target = $region9
  $region8: #{sage_encoder_forward.3} parent=0 // pred_region
    _
  $region9: #{sage_encoder_forward.3} parent=0 // pred_fallthru
    _
  // Predicated region
  $region10: #{sage_encoder_forward.3} parent=0 // pred_check
    _
  $region11: #{sage_encoder_forward.3} parent=0 // pred_check_branch
    %14 = sbr.rel (0) target = $region13
  $region12: #{sage_encoder_forward.3} parent=0 // pred_region
    _
  $region13: #{sage_encoder_forward.3} parent=0 // pred_fallthru
    _
  // Predicated region
  $region14: #{sage_encoder_forward.3} parent=0 // pred_check
    _
  $region15: #{sage_encoder_forward.3} parent=0 // pred_check_branch
    %16 = sbr.rel (0) target = $region17
  $region16: #{sage_encoder_forward.3} parent=0 // pred_region
    _
  $region17: #{sage_encoder_forward.3} parent=0 // pred_fallthru
    _
  %p17 = scmp.eq.s32.totalorder 0, 0
  // Predicated region
  $region18: #{sage_encoder_forward.3} parent=0 // pred_check
    %p18 = pneg %p17
  $region19: #{sage_encoder_forward.3} parent=0 // pred_check_branch
    %20 = sbr.rel (%p18) target = $region21
  $region20: #{sage_encoder_forward.3} parent=0 // pred_region
    %21 = vst [vmem:[#allocation2] sm:$0xff] 0.0
    %22 = vst [vmem:[#allocation2 + $0x8] sm:$0xff] 0.0
    %23 = vst [vmem:[#allocation2 + $0x10] sm:$0xff] 0.0
    %24 = vst [vmem:[#allocation2 + $0x18] sm:$0xff] 0.0
    %25 = vst [vmem:[#allocation2 + $0x20] sm:$0xff] 0.0
    %26 = vst [vmem:[#allocation2 + $0x28] sm:$0xff] 0.0
    %27 = vst [vmem:[#allocation2 + $0x30] sm:$0xff] 0.0
    %28 = vst [vmem:[#allocation2 + $0x38] sm:$0xff] 0.0
    %29 = vst [vmem:[#allocation2 + $0x40] sm:$0xff] 0.0
    %30 = vst [vmem:[#allocation2 + $0x48] sm:$0xff] 0.0
    %31 = vst [vmem:[#allocation2 + $0x50] sm:$0xff] 0.0
    %32 = vst [vmem:[#allocation2 + $0x58] sm:$0xff] 0.0
    %33 = vst [vmem:[#allocation2 + $0x60] sm:$0xff] 0.0
    %34 = vst [vmem:[#allocation2 + $0x68] sm:$0xff] 0.0
    %35 = vst [vmem:[#allocation2 + $0x70] sm:$0xff] 0.0
    %36 = vst [vmem:[#allocation2 + $0x78] sm:$0xff] 0.0
    %37 = vst [vmem:[#allocation2 + $0x80] sm:$0xff] 0.0
    %38 = vst [vmem:[#allocation2 + $0x88] sm:$0xff] 0.0
    %39 = vst [vmem:[#allocation2 + $0x90] sm:$0xff] 0.0
    %40 = vst [vmem:[#allocation2 + $0x98] sm:$0xff] 0.0
    %41 = vst [vmem:[#allocation2 + $0xa0] sm:$0xff] 0.0
    %42 = vst [vmem:[#allocation2 + $0xa8] sm:$0xff] 0.0
    %43 = vst [vmem:[#allocation2 + $0xb0] sm:$0xff] 0.0
    %44 = vst [vmem:[#allocation2 + $0xb8] sm:$0xff] 0.0
    %45 = vst [vmem:[#allocation2 + $0xc0] sm:$0xff] 0.0
    %46 = vst [vmem:[#allocation2 + $0xc8] sm:$0xff] 0.0
    %47 = vst [vmem:[#allocation2 + $0xd0] sm:$0xff] 0.0
    %48 = vst [vmem:[#allocation2 + $0xd8] sm:$0xff] 0.0
    %49 = vst [vmem:[#allocation2 + $0xe0] sm:$0xff] 0.0
    %50 = vst [vmem:[#allocation2 + $0xe8] sm:$0xff] 0.0
    %51 = vst [vmem:[#allocation2 + $0xf0] sm:$0xff] 0.0
    %52 = vst [vmem:[#allocation2 + $0xf8] sm:$0xff] 0.0
  $region21: #{sage_encoder_forward.3} parent=0 // pred_fallthru
    _
  %v53 = vld [vmem:[%s0] sm:$0xff]
  %v54 = vld [vmem:[%s0 + $0x8] sm:$0xff]
  %v55 = vld [vmem:[%s0 + $0x10] sm:$0xff]
  %v56 = vld [vmem:[%s0 + $0x18] sm:$0xff]
  %v57 = vld [vmem:[%s0 + $0x20] sm:$0xff]
  %v58 = vld [vmem:[%s0 + $0x28] sm:$0xff]
  %v59 = vld [vmem:[%s0 + $0x30] sm:$0xff]
  %v60 = vld [vmem:[%s0 + $0x38] sm:$0xff]
  %v61 = vld [vmem:[%s0 + $0x40] sm:$0xff]
  %v62 = vld [vmem:[%s0 + $0x48] sm:$0xff]
  %v63 = vld [vmem:[%s0 + $0x50] sm:$0xff]
  %v64 = vld [vmem:[%s0 + $0x58] sm:$0xff]
  %v65 = vld [vmem:[%s0 + $0x60] sm:$0xff]
  %v66 = vld [vmem:[%s0 + $0x68] sm:$0xff]
  %v67 = vld [vmem:[%s0 + $0x70] sm:$0xff]
  %v68 = vld [vmem:[%s0 + $0x78] sm:$0xff]
  %v69 = vunpack.c.0.s8 %v53
  %v70 = vunpack.c.0.s8 %v54
  %v71 = vunpack.c.1.s8 %v53
  %v72 = vunpack.c.1.s8 %v54
  %v73 = vunpack.c.2.s8 %v53
  %v74 = vunpack.c.2.s8 %v54
  %v75 = vunpack.c.3.s8 %v53
  %v76 = vunpack.c.3.s8 %v54
  %v77 = vunpack.c.0.s8 %v55
  %v78 = vunpack.c.0.s8 %v56
  %v79 = vunpack.c.1.s8 %v55
  %v80 = vunpack.c.1.s8 %v56
  %v81 = vunpack.c.2.s8 %v55
  %v82 = vunpack.c.2.s8 %v56
  %v83 = vunpack.c.3.s8 %v55
  %v84 = vunpack.c.3.s8 %v56
  %v85 = vunpack.c.0.s8 %v57
  %v86 = vunpack.c.0.s8 %v58
  %v87 = vunpack.c.1.s8 %v57
  %v88 = vunpack.c.1.s8 %v58
  %v89 = vunpack.c.2.s8 %v57
  %v90 = vunpack.c.2.s8 %v58
  %v91 = vunpack.c.3.s8 %v57
  %v92 = vunpack.c.3.s8 %v58
  %v93 = vunpack.c.0.s8 %v59
  %v94 = vunpack.c.0.s8 %v60
  %v95 = vunpack.c.1.s8 %v59
  %v96 = vunpack.c.1.s8 %v60
  %v97 = vunpack.c.2.s8 %v59
  %v98 = vunpack.c.2.s8 %v60
  %v99 = vunpack.c.3.s8 %v59
  %v100 = vunpack.c.3.s8 %v60
  %v101 = vunpack.c.0.s8 %v61
  %v102 = vunpack.c.0.s8 %v62
  %v103 = vunpack.c.1.s8 %v61
  %v104 = vunpack.c.1.s8 %v62
  %v105 = vunpack.c.2.s8 %v61
  %v106 = vunpack.c.2.s8 %v62
  %v107 = vunpack.c.3.s8 %v61
  %v108 = vunpack.c.3.s8 %v62
  %v109 = vunpack.c.0.s8 %v63
  %v110 = vunpack.c.0.s8 %v64
  %v111 = vunpack.c.1.s8 %v63
  %v112 = vunpack.c.1.s8 %v64
  %v113 = vunpack.c.2.s8 %v63
  %v114 = vunpack.c.2.s8 %v64
  %v115 = vunpack.c.3.s8 %v63
  %v116 = vunpack.c.3.s8 %v64
  %v117 = vunpack.c.0.s8 %v65
  %v118 = vunpack.c.0.s8 %v66
  %v119 = vunpack.c.1.s8 %v65
  %v120 = vunpack.c.1.s8 %v66
  %v121 = vunpack.c.2.s8 %v65
  %v122 = vunpack.c.2.s8 %v66
  %v123 = vunpack.c.3.s8 %v65
  %v124 = vunpack.c.3.s8 %v66
  %v125 = vunpack.c.0.s8 %v67
  %v126 = vunpack.c.0.s8 %v68
  %v127 = vunpack.c.1.s8 %v67
  %v128 = vunpack.c.1.s8 %v68
  %v129 = vunpack.c.2.s8 %v67
  %v130 = vunpack.c.2.s8 %v68
  %v131 = vunpack.c.3.s8 %v67
  %v132 = vunpack.c.3.s8 %v68
  %v133 = vcvt.s32.f32 %v69
  %v134 = vcvt.s32.f32 %v70
  %v135 = vcvt.s32.f32 %v71
  %v136 = vcvt.s32.f32 %v72
  %v137 = vcvt.s32.f32 %v73
  %v138 = vcvt.s32.f32 %v74
  %v139 = vcvt.s32.f32 %v75
  %v140 = vcvt.s32.f32 %v76
  %v141 = vcvt.s32.f32 %v77
  %v142 = vcvt.s32.f32 %v78
  %v143 = vcvt.s32.f32 %v79
  %v144 = vcvt.s32.f32 %v80
  %v145 = vcvt.s32.f32 %v81
  %v146 = vcvt.s32.f32 %v82
  %v147 = vcvt.s32.f32 %v83
  %v148 = vcvt.s32.f32 %v84
  %v149 = vcvt.s32.f32 %v85
  %v150 = vcvt.s32.f32 %v86
  %v151 = vcvt.s32.f32 %v87
  %v152 = vcvt.s32.f32 %v88
  %v153 = vcvt.s32.f32 %v89
  %v154 = vcvt.s32.f32 %v90
  %v155 = vcvt.s32.f32 %v91
  %v156 = vcvt.s32.f32 %v92
  %v157 = vcvt.s32.f32 %v93
  %v158 = vcvt.s32.f32 %v94
  %v159 = vcvt.s32.f32 %v95
  %v160 = vcvt.s32.f32 %v96
  %v161 = vcvt.s32.f32 %v97
  %v162 = vcvt.s32.f32 %v98
  %v163 = vcvt.s32.f32 %v99
  %v164 = vcvt.s32.f32 %v100
  %v165 = vcvt.s32.f32 %v101
  %v166 = vcvt.s32.f32 %v102
  %v167 = vcvt.s32.f32 %v103
  %v168 = vcvt.s32.f32 %v104
  %v169 = vcvt.s32.f32 %v105
  %v170 = vcvt.s32.f32 %v106
  %v171 = vcvt.s32.f32 %v107
  %v172 = vcvt.s32.f32 %v108
  %v173 = vcvt.s32.f32 %v109
  %v174 = vcvt.s32.f32 %v110
  %v175 = vcvt.s32.f32 %v111
  %v176 = vcvt.s32.f32 %v112
  %v177 = vcvt.s32.f32 %v113
  %v178 = vcvt.s32.f32 %v114
  %v179 = vcvt.s32.f32 %v115
  %v180 = vcvt.s32.f32 %v116
  %v181 = vcvt.s32.f32 %v117
  %v182 = vcvt.s32.f32 %v118
  %v183 = vcvt.s32.f32 %v119
  %v184 = vcvt.s32.f32 %v120
  %v185 = vcvt.s32.f32 %v121
  %v186 = vcvt.s32.f32 %v122
  %v187 = vcvt.s32.f32 %v123
  %v188 = vcvt.s32.f32 %v124
  %v189 = vcvt.s32.f32 %v125
  %v190 = vcvt.s32.f32 %v126
  %v191 = vcvt.s32.f32 %v127
  %v192 = vcvt.s32.f32 %v128
  %v193 = vcvt.s32.f32 %v129
  %v194 = vcvt.s32.f32 %v130
  %v195 = vcvt.s32.f32 %v131
  %v196 = vcvt.s32.f32 %v132
  %v197 = vld [vmem:[#allocation2] sm:$0xff]
  %v198 = vld [vmem:[#allocation2 + $0x8] sm:$0xff]
  %v199 = vld [vmem:[#allocation2 + $0x10] sm:$0xff]
  %v200 = vld [vmem:[#allocation2 + $0x18] sm:$0xff]
  %v201 = vld [vmem:[#allocation2 + $0x20] sm:$0xff]
  %v202 = vld [vmem:[#allocation2 + $0x28] sm:$0xff]
  %v203 = vld [vmem:[#allocation2 + $0x30] sm:$0xff]
  %v204 = vld [vmem:[#allocation2 + $0x38] sm:$0xff]
  %v205 = vld [vmem:[#allocation2 + $0x40] sm:$0xff]
  %v206 = vld [vmem:[#allocation2 + $0x48] sm:$0xff]
  %v207 = vld [vmem:[#allocation2 + $0x50] sm:$0xff]
  %v208 = vld [vmem:[#allocation2 + $0x58] sm:$0xff]
  %v209 = vld [vmem:[#allocation2 + $0x60] sm:$0xff]
  %v210 = vld [vmem:[#allocation2 + $0x68] sm:$0xff]
  %v211 = vld [vmem:[#allocation2 + $0x70] sm:$0xff]
  %v212 = vld [vmem:[#allocation2 + $0x78] sm:$0xff]
  %v213 = vld [vmem:[#allocation2 + $0x80] sm:$0xff]
  %v214 = vld [vmem:[#allocation2 + $0x88] sm:$0xff]
  %v215 = vld [vmem:[#allocation2 + $0x90] sm:$0xff]
  %v216 = vld [vmem:[#allocation2 + $0x98] sm:$0xff]
  %v217 = vld [vmem:[#allocation2 + $0xa0] sm:$0xff]
  %v218 = vld [vmem:[#allocation2 + $0xa8] sm:$0xff]
  %v219 = vld [vmem:[#allocation2 + $0xb0] sm:$0xff]
  %v220 = vld [vmem:[#allocation2 + $0xb8] sm:$0xff]
  %v221 = vld [vmem:[#allocation2 + $0xc0] sm:$0xff]
  %v222 = vld [vmem:[#allocation2 + $0xc8] sm:$0xff]
  %v223 = vld [vmem:[#allocation2 + $0xd0] sm:$0xff]
  %v224 = vld [vmem:[#allocation2 + $0xd8] sm:$0xff]
  %v225 = vld [vmem:[#allocation2 + $0xe0] sm:$0xff]
  %v226 = vld [vmem:[#allocation2 + $0xe8] sm:$0xff]
  %v227 = vld [vmem:[#allocation2 + $0xf0] sm:$0xff]
  %v228 = vld [vmem:[#allocation2 + $0xf8] sm:$0xff]
  %v229 = vld [vmem:[%s1] sm:$0xff]
  %v230 = vld [vmem:[%s1 + $0x8] sm:$0xff]
  %v231 = vld [vmem:[%s1 + $0x10] sm:$0xff]
  %v232 = vld [vmem:[%s1 + $0x18] sm:$0xff]
  %v233 = vld [vmem:[%s1 + $0x20] sm:$0xff]
  %v234 = vld [vmem:[%s1 + $0x28] sm:$0xff]
  %v235 = vld [vmem:[%s1 + $0x30] sm:$0xff]
  %v236 = vld [vmem:[%s1 + $0x38] sm:$0xff]
  %v237 = vld [vmem:[%s1 + $0x40] sm:$0xff]
  %v238 = vld [vmem:[%s1 + $0x48] sm:$0xff]
  %v239 = vld [vmem:[%s1 + $0x50] sm:$0xff]
  %v240 = vld [vmem:[%s1 + $0x58] sm:$0xff]
  %v241 = vld [vmem:[%s1 + $0x60] sm:$0xff]
  %v242 = vld [vmem:[%s1 + $0x68] sm:$0xff]
  %v243 = vld [vmem:[%s1 + $0x70] sm:$0xff]
  %v244 = vld [vmem:[%s1 + $0x78] sm:$0xff]
  %v245 = vld [vmem:[%s1 + $0x80] sm:$0xff]
  %v246 = vld [vmem:[%s1 + $0x88] sm:$0xff]
  %v247 = vld [vmem:[%s1 + $0x90] sm:$0xff]
  %v248 = vld [vmem:[%s1 + $0x98] sm:$0xff]
  %v249 = vld [vmem:[%s1 + $0xa0] sm:$0xff]
  %v250 = vld [vmem:[%s1 + $0xa8] sm:$0xff]
  %v251 = vld [vmem:[%s1 + $0xb0] sm:$0xff]
  %v252 = vld [vmem:[%s1 + $0xb8] sm:$0xff]
  %v253 = vld [vmem:[%s1 + $0xc0] sm:$0xff]
  %v254 = vld [vmem:[%s1 + $0xc8] sm:$0xff]
  %v255 = vld [vmem:[%s1 + $0xd0] sm:$0xff]
  %v256 = vld [vmem:[%s1 + $0xd8] sm:$0xff]
  %v257 = vld [vmem:[%s1 + $0xe0] sm:$0xff]
  %v258 = vld [vmem:[%s1 + $0xe8] sm:$0xff]
  %v259 = vld [vmem:[%s1 + $0xf0] sm:$0xff]
  %v260 = vld [vmem:[%s1 + $0xf8] sm:$0xff]
  %261 = vmatprep.subr.mxu0 0.0
  %262 = vmatpush1.msra.mxu0 %v229
  %263 = vmatprep.subr.mxu0 0.0
  %264 = vmatpush1.msra.mxu0 %v230
  %265 = vmatprep.subr.mxu0 0.0
  %266 = vmatpush1.msra.mxu0 %v231
  %267 = vmatprep.subr.mxu0 0.0
  %268 = vmatpush1.msra.mxu0 %v232
  %269 = vmatprep.subr.mxu0 0.0
  %270 = vmatpush1.msra.mxu0 %v233
  %271 = vmatprep.subr.mxu0 0.0
  %272 = vmatpush1.msra.mxu0 %v234
  %273 = vmatprep.subr.mxu0 0.0
  %274 = vmatpush1.msra.mxu0 %v235
  %275 = vmatprep.subr.mxu0 0.0
  %276 = vmatpush1.msra.mxu0 %v236
  %277 = vmatprep.subr.mxu0 0.0
  %278 = vmatpush1.msra.mxu0 %v237
  %279 = vmatprep.subr.mxu0 0.0
  %280 = vmatpush1.msra.mxu0 %v238
  %281 = vmatprep.subr.mxu0 0.0
  %282 = vmatpush1.msra.mxu0 %v239
  %283 = vmatprep.subr.mxu0 0.0
  %284 = vmatpush1.msra.mxu0 %v240
  %285 = vmatprep.subr.mxu0 0.0
  %286 = vmatpush1.msra.mxu0 %v241
  %287 = vmatprep.subr.mxu0 0.0
  %288 = vmatpush1.msra.mxu0 %v242
  %289 = vmatprep.subr.mxu0 0.0
  %290 = vmatpush1.msra.mxu0 %v243
  %291 = vmatprep.subr.mxu0 0.0
  %292 = vmatpush1.msra.mxu0 %v244
  %293 = vmatprep.subr.mxu0 0.0
  %294 = vmatpush1.msra.mxu0 %v245
  %295 = vmatprep.subr.mxu0 0.0
  %296 = vmatpush1.msra.mxu0 %v246
  %297 = vmatprep.subr.mxu0 0.0
  %298 = vmatpush1.msra.mxu0 %v247
  %299 = vmatprep.subr.mxu0 0.0
  %300 = vmatpush1.msra.mxu0 %v248
  %301 = vmatprep.subr.mxu0 0.0
  %302 = vmatpush1.msra.mxu0 %v249
  %303 = vmatprep.subr.mxu0 0.0
  %304 = vmatpush1.msra.mxu0 %v250
  %305 = vmatprep.subr.mxu0 0.0
  %306 = vmatpush1.msra.mxu0 %v251
  %307 = vmatprep.subr.mxu0 0.0
  %308 = vmatpush1.msra.mxu0 %v252
  %309 = vmatprep.subr.mxu0 0.0
  %310 = vmatpush1.msra.mxu0 %v253
  %311 = vmatprep.subr.mxu0 0.0
  %312 = vmatpush1.msra.mxu0 %v254
  %313 = vmatprep.subr.mxu0 0.0
  %314 = vmatpush1.msra.mxu0 %v255
  %315 = vmatprep.subr.mxu0 0.0
  %316 = vmatpush1.msra.mxu0 %v256
  %317 = vmatprep.subr.mxu0 0.0
  %318 = vmatpush1.msra.mxu0 %v257
  %319 = vmatprep.subr.mxu0 0.0
  %320 = vmatpush1.msra.mxu0 %v258
  %321 = vmatprep.subr.mxu0 0.0
  %322 = vmatpush1.msra.mxu0 %v259
  %323 = vmatprep.subr.mxu0 0.0
  %324 = vmatpush1.msra.mxu0 %v260
  %325 = vmatprep.mubr.f32.mxu0 %v134
  %326 = vmatmul.mubr.f32.gmra.mrb[0].mxu0 %v133
  %v327 = vpop.f32.mrb[0].mxu0
  %v328 = vadd.f32 0.0, %v327
  %v329 = vpop.f32.mrb[0].mxu0
  %330 = vmatprep.mubr.f32.mxu0 %v136
  %331 = vmatmul.mubr.f32.gmra.mrb[0].mxu0 %v135
  %v332 = vpop.f32.mrb[0].mxu0
  %v333 = vadd.f32 0.0, %v332
  %v334 = vpop.f32.mrb[0].mxu0
  %335 = vmatprep.mubr.f32.mxu0 %v138
  %336 = vmatmul.mubr.f32.gmra.mrb[0].mxu0 %v137
  %v337 = vpop.f32.mrb[0].mxu0
  %v338 = vadd.f32 0.0, %v337
  %v339 = vpop.f32.mrb[0].mxu0
  %340 = vmatprep.mubr.f32.mxu0 %v140
  %341 = vmatmul.mubr.f32.gmra.mrb[0].mxu0 %v139
  %v342 = vpop.f32.mrb[0].mxu0
  %v343 = vadd.f32 0.0, %v342
  %v344 = vpop.f32.mrb[0].mxu0
  %345 = vmatprep.mubr.f32.mxu0 %v142
  %346 = vmatmul.mubr.f32.gmra.mrb[0].mxu0 %v141
  %v347 = vpop.f32.mrb[0].mxu0
  %v348 = vadd.f32 0.0, %v347
  %v349 = vpop.f32.mrb[0].mxu0
  %350 = vmatprep.mubr.f32.mxu0 %v144
  %351 = vmatmul.mubr.f32.gmra.mrb[0].mxu0 %v143
  %v352 = vpop.f32.mrb[0].mxu0
  %v353 = vadd.f32 0.0, %v352
  %v354 = vpop.f32.mrb[0].mxu0
  %355 = vmatprep.mubr.f32.mxu0 %v146
  %356 = vmatmul.mubr.f32.gmra.mrb[0].mxu0 %v145
  %v357 = vpop.f32.mrb[0].mxu0
  %v358 = vadd.f32 0.0, %v357
  %v359 = vpop.f32.mrb[0].mxu0
  %360 = vmatprep.mubr.f32.mxu0 %v148
  %361 = vmatmul.mubr.f32.gmra.mrb[0].mxu0 %v147
  %v362 = vpop.f32.mrb[0].mxu0
  %v363 = vadd.f32 0.0, %v362
  %v364 = vpop.f32.mrb[0].mxu0
  %365 = vmatprep.mubr.f32.mxu0 %v150
  %366 = vmatmul.mubr.f32.gmra.mrb[0].mxu0 %v149
  %v367 = vpop.f32.mrb[0].mxu0
  %v368 = vadd.f32 0.0, %v367
  %v369 = vpop.f32.mrb[0].mxu0
  %370 = vmatprep.mubr.f32.mxu0 %v152
  %371 = vmatmul.mubr.f32.gmra.mrb[0].mxu0 %v151
  %v372 = vpop.f32.mrb[0].mxu0
  %v373 = vadd.f32 0.0, %v372
  %v374 = vpop.f32.mrb[0].mxu0
  %375 = vmatprep.mubr.f32.mxu0 %v154
  %376 = vmatmul.mubr.f32.gmra.mrb[0].mxu0 %v153
  %v377 = vpop.f32.mrb[0].mxu0
  %v378 = vadd.f32 0.0, %v377
  %v379 = vpop.f32.mrb[0].mxu0
  %380 = vmatprep.mubr.f32.mxu0 %v156
  %381 = vmatmul.mubr.f32.gmra.mrb[0].mxu0 %v155
  %v382 = vpop.f32.mrb[0].mxu0
  %v383 = vadd.f32 0.0, %v382
  %v384 = vpop.f32.mrb[0].mxu0
  %385 = vmatprep.mubr.f32.mxu0 %v158
  %386 = vmatmul.mubr.f32.gmra.mrb[0].mxu0 %v157
  %v387 = vpop.f32.mrb[0].mxu0
  %v388 = vadd.f32 0.0, %v387
  %v389 = vpop.f32.mrb[0].mxu0
  %390 = vmatprep.mubr.f32.mxu0 %v160
  %391 = vmatmul.mubr.f32.gmra.mrb[0].mxu0 %v159
  %v392 = vpop.f32.mrb[0].mxu0
  %v393 = vadd.f32 0.0, %v392
  %v394 = vpop.f32.mrb[0].mxu0
  %395 = vmatprep.mubr.f32.mxu0 %v162
  %396 = vmatmul.mubr.f32.gmra.mrb[0].mxu0 %v161
  %v397 = vpop.f32.mrb[0].mxu0
  %v398 = vadd.f32 0.0, %v397
  %v399 = vpop.f32.mrb[0].mxu0
  %400 = vmatprep.mubr.f32.mxu0 %v164
  %401 = vmatmul.mubr.f32.gmra.mrb[0].mxu0 %v163
  %v402 = vpop.f32.mrb[0].mxu0
  %v403 = vadd.f32 0.0, %v402
  %v404 = vpop.f32.mrb[0].mxu0
  %405 = vmatprep.mubr.f32.mxu0 %v166
  %406 = vmatmul.mubr.f32.gmra.mrb[0].mxu0 %v165
  %v407 = vpop.f32.mrb[0].mxu0
  %v408 = vadd.f32 0.0, %v407
  %v409 = vpop.f32.mrb[0].mxu0
  %410 = vmatprep.mubr.f32.mxu0 %v168
  %411 = vmatmul.mubr.f32.gmra.mrb[0].mxu0 %v167
  %v412 = vpop.f32.mrb[0].mxu0
  %v413 = vadd.f32 0.0, %v412
  %v414 = vpop.f32.mrb[0].mxu0
  %415 = vmatprep.mubr.f32.mxu0 %v170
  %416 = vmatmul.mubr.f32.gmra.mrb[0].mxu0 %v169
  %v417 = vpop.f32.mrb[0].mxu0
  %v418 = vadd.f32 0.0, %v417
  %v419 = vpop.f32.mrb[0].mxu0
  %420 = vmatprep.mubr.f32.mxu0 %v172
  %421 = vmatmul.mubr.f32.gmra.mrb[0].mxu0 %v171
  %v422 = vpop.f32.mrb[0].mxu0
  %v423 = vadd.f32 0.0, %v422
  %v424 = vpop.f32.mrb[0].mxu0
  %425 = vmatprep.mubr.f32.mxu0 %v174
  %426 = vmatmul.mubr.f32.gmra.mrb[0].mxu0 %v173
  %v427 = vpop.f32.mrb[0].mxu0
  %v428 = vadd.f32 0.0, %v427
  %v429 = vpop.f32.mrb[0].mxu0
  %430 = vmatprep.mubr.f32.mxu0 %v176
  %431 = vmatmul.mubr.f32.gmra.mrb[0].mxu0 %v175
  %v432 = vpop.f32.mrb[0].mxu0
  %v433 = vadd.f32 0.0, %v432
  %v434 = vpop.f32.mrb[0].mxu0
  %435 = vmatprep.mubr.f32.mxu0 %v178
  %436 = vmatmul.mubr.f32.gmra.mrb[0].mxu0 %v177
  %v437 = vpop.f32.mrb[0].mxu0
  %v438 = vadd.f32 0.0, %v437
  %v439 = vpop.f32.mrb[0].mxu0
  %440 = vmatprep.mubr.f32.mxu0 %v180
  %441 = vmatmul.mubr.f32.gmra.mrb[0].mxu0 %v179
  %v442 = vpop.f32.mrb[0].mxu0
  %v443 = vadd.f32 0.0, %v442
  %v444 = vpop.f32.mrb[0].mxu0
  %445 = vmatprep.mubr.f32.mxu0 %v182
  %446 = vmatmul.mubr.f32.gmra.mrb[0].mxu0 %v181
  %v447 = vpop.f32.mrb[0].mxu0
  %v448 = vadd.f32 0.0, %v447
  %v449 = vpop.f32.mrb[0].mxu0
  %450 = vmatprep.mubr.f32.mxu0 %v184
  %451 = vmatmul.mubr.f32.gmra.mrb[0].mxu0 %v183
  %v452 = vpop.f32.mrb[0].mxu0
  %v453 = vadd.f32 0.0, %v452
  %v454 = vpop.f32.mrb[0].mxu0
  %455 = vmatprep.mubr.f32.mxu0 %v186
  %456 = vmatmul.mubr.f32.gmra.mrb[0].mxu0 %v185
  %v457 = vpop.f32.mrb[0].mxu0
  %v458 = vadd.f32 0.0, %v457
  %v459 = vpop.f32.mrb[0].mxu0
  %460 = vmatprep.mubr.f32.mxu0 %v188
  %461 = vmatmul.mubr.f32.gmra.mrb[0].mxu0 %v187
  %v462 = vpop.f32.mrb[0].mxu0
  %v463 = vadd.f32 0.0, %v462
  %v464 = vpop.f32.mrb[0].mxu0
  %465 = vmatprep.mubr.f32.mxu0 %v190
  %466 = vmatmul.mubr.f32.gmra.mrb[0].mxu0 %v189
  %v467 = vpop.f32.mrb[0].mxu0
  %v468 = vadd.f32 0.0, %v467
  %v469 = vpop.f32.mrb[0].mxu0
  %470 = vmatprep.mubr.f32.mxu0 %v192
  %471 = vmatmul.mubr.f32.gmra.mrb[0].mxu0 %v191
  %v472 = vpop.f32.mrb[0].mxu0
  %v473 = vadd.f32 0.0, %v472
  %v474 = vpop.f32.mrb[0].mxu0
  %475 = vmatprep.mubr.f32.mxu0 %v194
  %476 = vmatmul.mubr.f32.gmra.mrb[0].mxu0 %v193
  %v477 = vpop.f32.mrb[0].mxu0
  %v478 = vadd.f32 0.0, %v477
  %v479 = vpop.f32.mrb[0].mxu0
  %480 = vmatprep.mubr.f32.mxu0 %v196
  %481 = vmatmul.mubr.f32.gmra.mrb[0].mxu0 %v195
  %v482 = vpop.f32.mrb[0].mxu0
  %v483 = vadd.f32 0.0, %v482
  %v484 = vpop.f32.mrb[0].mxu0
  %485 = vdwg.mxu0
  %v486 = vadd.f32 %v197, %v328
  %v487 = vadd.f32 %v198, %v333
  %v488 = vadd.f32 %v199, %v338
  %v489 = vadd.f32 %v200, %v343
  %v490 = vadd.f32 %v201, %v348
  %v491 = vadd.f32 %v202, %v353
  %v492 = vadd.f32 %v203, %v358
  %v493 = vadd.f32 %v204, %v363
  %v494 = vadd.f32 %v205, %v368
  %v495 = vadd.f32 %v206, %v373
  %v496 = vadd.f32 %v207, %v378
  %v497 = vadd.f32 %v208, %v383
  %v498 = vadd.f32 %v209, %v388
  %v499 = vadd.f32 %v210, %v393
  %v500 = vadd.f32 %v211, %v398
  %v501 = vadd.f32 %v212, %v403
  %v502 = vadd.f32 %v213, %v408
  %v503 = vadd.f32 %v214, %v413
  %v504 = vadd.f32 %v215, %v418
  %v505 = vadd.f32 %v216, %v423
  %v506 = vadd.f32 %v217, %v428
  %v507 = vadd.f32 %v218, %v433
  %v508 = vadd.f32 %v219, %v438
  %v509 = vadd.f32 %v220, %v443
  %v510 = vadd.f32 %v221, %v448
  %v511 = vadd.f32 %v222, %v453
  %v512 = vadd.f32 %v223, %v458
  %v513 = vadd.f32 %v224, %v463
  %v514 = vadd.f32 %v225, %v468
  %v515 = vadd.f32 %v226, %v473
  %v516 = vadd.f32 %v227, %v478
  %v517 = vadd.f32 %v228, %v483
  %518 = vst [vmem:[#allocation2] sm:$0xff] %v486
  %519 = vst [vmem:[#allocation2 + $0x8] sm:$0xff] %v487
  %520 = vst [vmem:[#allocation2 + $0x10] sm:$0xff] %v488
  %521 = vst [vmem:[#allocation2 + $0x18] sm:$0xff] %v489
  %522 = vst [vmem:[#allocation2 + $0x20] sm:$0xff] %v490
  %523 = vst [vmem:[#allocation2 + $0x28] sm:$0xff] %v491
  %524 = vst [vmem:[#allocation2 + $0x30] sm:$0xff] %v492
  %525 = vst [vmem:[#allocation2 + $0x38] sm:$0xff] %v493
  %526 = vst [vmem:[#allocation2 + $0x40] sm:$0xff] %v494
  %527 = vst [vmem:[#allocation2 + $0x48] sm:$0xff] %v495
  %528 = vst [vmem:[#allocation2 + $0x50] sm:$0xff] %v496
  %529 = vst [vmem:[#allocation2 + $0x58] sm:$0xff] %v497
  %530 = vst [vmem:[#allocation2 + $0x60] sm:$0xff] %v498
  %531 = vst [vmem:[#allocation2 + $0x68] sm:$0xff] %v499
  %532 = vst [vmem:[#allocation2 + $0x70] sm:$0xff] %v500
  %533 = vst [vmem:[#allocation2 + $0x78] sm:$0xff] %v501
  %534 = vst [vmem:[#allocation2 + $0x80] sm:$0xff] %v502
  %535 = vst [vmem:[#allocation2 + $0x88] sm:$0xff] %v503
  %536 = vst [vmem:[#allocation2 + $0x90] sm:$0xff] %v504
  %537 = vst [vmem:[#allocation2 + $0x98] sm:$0xff] %v505
  %538 = vst [vmem:[#allocation2 + $0xa0] sm:$0xff] %v506
  %539 = vst [vmem:[#allocation2 + $0xa8] sm:$0xff] %v507
  %540 = vst [vmem:[#allocation2 + $0xb0] sm:$0xff] %v508
  %541 = vst [vmem:[#allocation2 + $0xb8] sm:$0xff] %v509
  %542 = vst [vmem:[#allocation2 + $0xc0] sm:$0xff] %v510
  %543 = vst [vmem:[#allocation2 + $0xc8] sm:$0xff] %v511
  %544 = vst [vmem:[#allocation2 + $0xd0] sm:$0xff] %v512
  %545 = vst [vmem:[#allocation2 + $0xd8] sm:$0xff] %v513
  %546 = vst [vmem:[#allocation2 + $0xe0] sm:$0xff] %v514
  %547 = vst [vmem:[#allocation2 + $0xe8] sm:$0xff] %v515
  %548 = vst [vmem:[#allocation2 + $0xf0] sm:$0xff] %v516
  %549 = vst [vmem:[#allocation2 + $0xf8] sm:$0xff] %v517
  // Predicated region
  $region22: #{sage_encoder_forward.3} parent=0 // pred_check
    %p550 = pneg %p17
  $region23: #{sage_encoder_forward.3} parent=0 // pred_check_branch
    %552 = sbr.rel (%p550) target = $region25
  $region24: #{sage_encoder_forward.3} parent=0 // pred_region
    %v553 = vld [vmem:[#allocation2] sm:$0xff]
    %v554 = vld [vmem:[#allocation2 + $0x8] sm:$0xff]
    %v555 = vld [vmem:[#allocation2 + $0x10] sm:$0xff]
    %v556 = vld [vmem:[#allocation2 + $0x18] sm:$0xff]
    %v557 = vld [vmem:[#allocation2 + $0x20] sm:$0xff]
    %v558 = vld [vmem:[#allocation2 + $0x28] sm:$0xff]
    %v559 = vld [vmem:[#allocation2 + $0x30] sm:$0xff]
    %v560 = vld [vmem:[#allocation2 + $0x38] sm:$0xff]
    %v561 = vld [vmem:[#allocation2 + $0x40] sm:$0xff]
    %v562 = vld [vmem:[#allocation2 + $0x48] sm:$0xff]
    %v563 = vld [vmem:[#allocation2 + $0x50] sm:$0xff]
    %v564 = vld [vmem:[#allocation2 + $0x58] sm:$0xff]
    %v565 = vld [vmem:[#allocation2 + $0x60] sm:$0xff]
    %v566 = vld [vmem:[#allocation2 + $0x68] sm:$0xff]
    %v567 = vld [vmem:[#allocation2 + $0x70] sm:$0xff]
    %v568 = vld [vmem:[#allocation2 + $0x78] sm:$0xff]
    %v569 = vld [vmem:[#allocation2 + $0x80] sm:$0xff]
    %v570 = vld [vmem:[#allocation2 + $0x88] sm:$0xff]
    %v571 = vld [vmem:[#allocation2 + $0x90] sm:$0xff]
    %v572 = vld [vmem:[#allocation2 + $0x98] sm:$0xff]
    %v573 = vld [vmem:[#allocation2 + $0xa0] sm:$0xff]
    %v574 = vld [vmem:[#allocation2 + $0xa8] sm:$0xff]
    %v575 = vld [vmem:[#allocation2 + $0xb0] sm:$0xff]
    %v576 = vld [vmem:[#allocation2 + $0xb8] sm:$0xff]
    %v577 = vld [vmem:[#allocation2 + $0xc0] sm:$0xff]
    %v578 = vld [vmem:[#allocation2 + $0xc8] sm:$0xff]
    %v579 = vld [vmem:[#allocation2 + $0xd0] sm:$0xff]
    %v580 = vld [vmem:[#allocation2 + $0xd8] sm:$0xff]
    %v581 = vld [vmem:[#allocation2 + $0xe0] sm:$0xff]
    %v582 = vld [vmem:[#allocation2 + $0xe8] sm:$0xff]
    %v583 = vld [vmem:[#allocation2 + $0xf0] sm:$0xff]
    %v584 = vld [vmem:[#allocation2 + $0xf8] sm:$0xff]
    %v585 = vld [vmem:[%s2] sm:$0xff]
    %v586 = vld [vmem:[%s2 + $0x8] sm:$0xff]
    %v587 = vld [vmem:[%s2 + $0x10] sm:$0xff]
    %v588 = vld [vmem:[%s2 + $0x18] sm:$0xff]
    %v589 = vld [vmem:[%s2 + $0x20] sm:$0xff]
    %v590 = vld [vmem:[%s2 + $0x28] sm:$0xff]
    %v591 = vld [vmem:[%s2 + $0x30] sm:$0xff]
    %v592 = vld [vmem:[%s2 + $0x38] sm:$0xff]
    %v593 = vld [vmem:[%s2 + $0x40] sm:$0xff]
    %v594 = vld [vmem:[%s2 + $0x48] sm:$0xff]
    %v595 = vld [vmem:[%s2 + $0x50] sm:$0xff]
    %v596 = vld [vmem:[%s2 + $0x58] sm:$0xff]
    %v597 = vld [vmem:[%s2 + $0x60] sm:$0xff]
    %v598 = vld [vmem:[%s2 + $0x68] sm:$0xff]
    %v599 = vld [vmem:[%s2 + $0x70] sm:$0xff]
    %v600 = vld [vmem:[%s2 + $0x78] sm:$0xff]
    %v601 = vld [vmem:[%s2 + $0x80] sm:$0xff]
    %v602 = vld [vmem:[%s2 + $0x88] sm:$0xff]
    %v603 = vld [vmem:[%s2 + $0x90] sm:$0xff]
    %v604 = vld [vmem:[%s2 + $0x98] sm:$0xff]
    %v605 = vld [vmem:[%s2 + $0xa0] sm:$0xff]
    %v606 = vld [vmem:[%s2 + $0xa8] sm:$0xff]
    %v607 = vld [vmem:[%s2 + $0xb0] sm:$0xff]
    %v608 = vld [vmem:[%s2 + $0xb8] sm:$0xff]
    %v609 = vld [vmem:[%s2 + $0xc0] sm:$0xff]
    %v610 = vld [vmem:[%s2 + $0xc8] sm:$0xff]
    %v611 = vld [vmem:[%s2 + $0xd0] sm:$0xff]
    %v612 = vld [vmem:[%s2 + $0xd8] sm:$0xff]
    %v613 = vld [vmem:[%s2 + $0xe0] sm:$0xff]
    %v614 = vld [vmem:[%s2 + $0xe8] sm:$0xff]
    %v615 = vld [vmem:[%s2 + $0xf0] sm:$0xff]
    %v616 = vld [vmem:[%s2 + $0xf8] sm:$0xff]
    %618 = vset.pattern.permute.xlu0 0
    %619 = vperm.xlu0 %618, %v585
    %v620 = vpop.permute.xlu0 %619
    %623 = vset.pattern.permute.xlu0 0
    %624 = vperm.xlu0 %623, %v586
    %v625 = vpop.permute.xlu0 %624
    %628 = vset.pattern.permute.xlu0 0
    %629 = vperm.xlu0 %628, %v587
    %v630 = vpop.permute.xlu0 %629
    %633 = vset.pattern.permute.xlu0 0
    %634 = vperm.xlu0 %633, %v588
    %v635 = vpop.permute.xlu0 %634
    %638 = vset.pattern.permute.xlu0 0
    %639 = vperm.xlu0 %638, %v589
    %v640 = vpop.permute.xlu0 %639
    %643 = vset.pattern.permute.xlu0 0
    %644 = vperm.xlu0 %643, %v590
    %v645 = vpop.permute.xlu0 %644
    %648 = vset.pattern.permute.xlu0 0
    %649 = vperm.xlu0 %648, %v591
    %v650 = vpop.permute.xlu0 %649
    %653 = vset.pattern.permute.xlu0 0
    %654 = vperm.xlu0 %653, %v592
    %v655 = vpop.permute.xlu0 %654
    %658 = vset.pattern.permute.xlu0 0
    %659 = vperm.xlu0 %658, %v593
    %v660 = vpop.permute.xlu0 %659
    %663 = vset.pattern.permute.xlu0 0
    %664 = vperm.xlu0 %663, %v594
    %v665 = vpop.permute.xlu0 %664
    %668 = vset.pattern.permute.xlu0 0
    %669 = vperm.xlu0 %668, %v595
    %v670 = vpop.permute.xlu0 %669
    %673 = vset.pattern.permute.xlu0 0
    %674 = vperm.xlu0 %673, %v596
    %v675 = vpop.permute.xlu0 %674
    %678 = vset.pattern.permute.xlu0 0
    %679 = vperm.xlu0 %678, %v597
    %v680 = vpop.permute.xlu0 %679
    %683 = vset.pattern.permute.xlu0 0
    %684 = vperm.xlu0 %683, %v598
    %v685 = vpop.permute.xlu0 %684
    %688 = vset.pattern.permute.xlu0 0
    %689 = vperm.xlu0 %688, %v599
    %v690 = vpop.permute.xlu0 %689
    %693 = vset.pattern.permute.xlu0 0
    %694 = vperm.xlu0 %693, %v600
    %v695 = vpop.permute.xlu0 %694
    %698 = vset.pattern.permute.xlu0 0
    %699 = vperm.xlu0 %698, %v601
    %v700 = vpop.permute.xlu0 %699
    %703 = vset.pattern.permute.xlu0 0
    %704 = vperm.xlu0 %703, %v602
    %v705 = vpop.permute.xlu0 %704
    %708 = vset.pattern.permute.xlu0 0
    %709 = vperm.xlu0 %708, %v603
    %v710 = vpop.permute.xlu0 %709
    %713 = vset.pattern.permute.xlu0 0
    %714 = vperm.xlu0 %713, %v604
    %v715 = vpop.permute.xlu0 %714
    %718 = vset.pattern.permute.xlu0 0
    %719 = vperm.xlu0 %718, %v605
    %v720 = vpop.permute.xlu0 %719
    %723 = vset.pattern.permute.xlu0 0
    %724 = vperm.xlu0 %723, %v606
    %v725 = vpop.permute.xlu0 %724
    %728 = vset.pattern.permute.xlu0 0
    %729 = vperm.xlu0 %728, %v607
    %v730 = vpop.permute.xlu0 %729
    %733 = vset.pattern.permute.xlu0 0
    %734 = vperm.xlu0 %733, %v608
    %v735 = vpop.permute.xlu0 %734
    %738 = vset.pattern.permute.xlu0 0
    %739 = vperm.xlu0 %738, %v609
    %v740 = vpop.permute.xlu0 %739
    %743 = vset.pattern.permute.xlu0 0
    %744 = vperm.xlu0 %743, %v610
    %v745 = vpop.permute.xlu0 %744
    %748 = vset.pattern.permute.xlu0 0
    %749 = vperm.xlu0 %748, %v611
    %v750 = vpop.permute.xlu0 %749
    %753 = vset.pattern.permute.xlu0 0
    %754 = vperm.xlu0 %753, %v612
    %v755 = vpop.permute.xlu0 %754
    %758 = vset.pattern.permute.xlu0 0
    %759 = vperm.xlu0 %758, %v613
    %v760 = vpop.permute.xlu0 %759
    %763 = vset.pattern.permute.xlu0 0
    %764 = vperm.xlu0 %763, %v614
    %v765 = vpop.permute.xlu0 %764
    %768 = vset.pattern.permute.xlu0 0
    %769 = vperm.xlu0 %768, %v615
    %v770 = vpop.permute.xlu0 %769
    %773 = vset.pattern.permute.xlu0 0
    %774 = vperm.xlu0 %773, %v616
    %v775 = vpop.permute.xlu0 %774
    %v777 = vmul.f32 %v553, %v620
    %v778 = vmul.f32 %v554, %v625
    %v779 = vmul.f32 %v555, %v630
    %v780 = vmul.f32 %v556, %v635
    %v781 = vmul.f32 %v557, %v640
    %v782 = vmul.f32 %v558, %v645
    %v783 = vmul.f32 %v559, %v650
    %v784 = vmul.f32 %v560, %v655
    %v785 = vmul.f32 %v561, %v660
    %v786 = vmul.f32 %v562, %v665
    %v787 = vmul.f32 %v563, %v670
    %v788 = vmul.f32 %v564, %v675
    %v789 = vmul.f32 %v565, %v680
    %v790 = vmul.f32 %v566, %v685
    %v791 = vmul.f32 %v567, %v690
    %v792 = vmul.f32 %v568, %v695
    %v793 = vmul.f32 %v569, %v700
    %v794 = vmul.f32 %v570, %v705
    %v795 = vmul.f32 %v571, %v710
    %v796 = vmul.f32 %v572, %v715
    %v797 = vmul.f32 %v573, %v720
    %v798 = vmul.f32 %v574, %v725
    %v799 = vmul.f32 %v575, %v730
    %v800 = vmul.f32 %v576, %v735
    %v801 = vmul.f32 %v577, %v740
    %v802 = vmul.f32 %v578, %v745
    %v803 = vmul.f32 %v579, %v750
    %v804 = vmul.f32 %v580, %v755
    %v805 = vmul.f32 %v581, %v760
    %v806 = vmul.f32 %v582, %v765
    %v807 = vmul.f32 %v583, %v770
    %v808 = vmul.f32 %v584, %v775
    %v809 = vld [vmem:[%s3] sm:$0xff]
    %v810 = vld [vmem:[%s3 + $0x8] sm:$0xff]
    %v811 = vld [vmem:[%s3 + $0x10] sm:$0xff]
    %v812 = vld [vmem:[%s3 + $0x18] sm:$0xff]
    %v813 = vld [vmem:[%s3 + $0x20] sm:$0xff]
    %v814 = vld [vmem:[%s3 + $0x28] sm:$0xff]
    %v815 = vld [vmem:[%s3 + $0x30] sm:$0xff]
    %v816 = vld [vmem:[%s3 + $0x38] sm:$0xff]
    %v817 = vld [vmem:[%s3 + $0x40] sm:$0xff]
    %v818 = vld [vmem:[%s3 + $0x48] sm:$0xff]
    %v819 = vld [vmem:[%s3 + $0x50] sm:$0xff]
    %v820 = vld [vmem:[%s3 + $0x58] sm:$0xff]
    %v821 = vld [vmem:[%s3 + $0x60] sm:$0xff]
    %v822 = vld [vmem:[%s3 + $0x68] sm:$0xff]
    %v823 = vld [vmem:[%s3 + $0x70] sm:$0xff]
    %v824 = vld [vmem:[%s3 + $0x78] sm:$0xff]
    %v825 = vld [vmem:[%s3 + $0x80] sm:$0xff]
    %v826 = vld [vmem:[%s3 + $0x88] sm:$0xff]
    %v827 = vld [vmem:[%s3 + $0x90] sm:$0xff]
    %v828 = vld [vmem:[%s3 + $0x98] sm:$0xff]
    %v829 = vld [vmem:[%s3 + $0xa0] sm:$0xff]
    %v830 = vld [vmem:[%s3 + $0xa8] sm:$0xff]
    %v831 = vld [vmem:[%s3 + $0xb0] sm:$0xff]
    %v832 = vld [vmem:[%s3 + $0xb8] sm:$0xff]
    %v833 = vld [vmem:[%s3 + $0xc0] sm:$0xff]
    %v834 = vld [vmem:[%s3 + $0xc8] sm:$0xff]
    %v835 = vld [vmem:[%s3 + $0xd0] sm:$0xff]
    %v836 = vld [vmem:[%s3 + $0xd8] sm:$0xff]
    %v837 = vld [vmem:[%s3 + $0xe0] sm:$0xff]
    %v838 = vld [vmem:[%s3 + $0xe8] sm:$0xff]
    %v839 = vld [vmem:[%s3 + $0xf0] sm:$0xff]
    %v840 = vld [vmem:[%s3 + $0xf8] sm:$0xff]
    %v841 = vadd.f32 %v777, %v809
    %v842 = vadd.f32 %v778, %v810
    %v843 = vadd.f32 %v779, %v811
    %v844 = vadd.f32 %v780, %v812
    %v845 = vadd.f32 %v781, %v813
    %v846 = vadd.f32 %v782, %v814
    %v847 = vadd.f32 %v783, %v815
    %v848 = vadd.f32 %v784, %v816
    %v849 = vadd.f32 %v785, %v817
    %v850 = vadd.f32 %v786, %v818
    %v851 = vadd.f32 %v787, %v819
    %v852 = vadd.f32 %v788, %v820
    %v853 = vadd.f32 %v789, %v821
    %v854 = vadd.f32 %v790, %v822
    %v855 = vadd.f32 %v791, %v823
    %v856 = vadd.f32 %v792, %v824
    %v857 = vadd.f32 %v793, %v825
    %v858 = vadd.f32 %v794, %v826
    %v859 = vadd.f32 %v795, %v827
    %v860 = vadd.f32 %v796, %v828
    %v861 = vadd.f32 %v797, %v829
    %v862 = vadd.f32 %v798, %v830
    %v863 = vadd.f32 %v799, %v831
    %v864 = vadd.f32 %v800, %v832
    %v865 = vadd.f32 %v801, %v833
    %v866 = vadd.f32 %v802, %v834
    %v867 = vadd.f32 %v803, %v835
    %v868 = vadd.f32 %v804, %v836
    %v869 = vadd.f32 %v805, %v837
    %v870 = vadd.f32 %v806, %v838
    %v871 = vadd.f32 %v807, %v839
    %v872 = vadd.f32 %v808, %v840
    %v873 = vmul.f32 %v841, %v841
    %v874 = vmul.f32 %v842, %v842
    %v875 = vmul.f32 %v843, %v843
    %v876 = vmul.f32 %v844, %v844
    %v877 = vmul.f32 %v845, %v845
    %v878 = vmul.f32 %v846, %v846
    %v879 = vmul.f32 %v847, %v847
    %v880 = vmul.f32 %v848, %v848
    %v881 = vmul.f32 %v849, %v849
    %v882 = vmul.f32 %v850, %v850
    %v883 = vmul.f32 %v851, %v851
    %v884 = vmul.f32 %v852, %v852
    %v885 = vmul.f32 %v853, %v853
    %v886 = vmul.f32 %v854, %v854
    %v887 = vmul.f32 %v855, %v855
    %v888 = vmul.f32 %v856, %v856
    %v889 = vmul.f32 %v857, %v857
    %v890 = vmul.f32 %v858, %v858
    %v891 = vmul.f32 %v859, %v859
    %v892 = vmul.f32 %v860, %v860
    %v893 = vmul.f32 %v861, %v861
    %v894 = vmul.f32 %v862, %v862
    %v895 = vmul.f32 %v863, %v863
    %v896 = vmul.f32 %v864, %v864
    %v897 = vmul.f32 %v865, %v865
    %v898 = vmul.f32 %v866, %v866
    %v899 = vmul.f32 %v867, %v867
    %v900 = vmul.f32 %v868, %v868
    %v901 = vmul.f32 %v869, %v869
    %v902 = vmul.f32 %v870, %v870
    %v903 = vmul.f32 %v871, %v871
    %v904 = vmul.f32 %v872, %v872
    %905 = vadd.xlane.f32.xlu0 %v873
    %v906 = vpop.xlane.xlu0 %905
    %907 = vadd.xlane.f32.xlu0 %v874
    %v908 = vpop.xlane.xlu0 %907
    %909 = vadd.xlane.f32.xlu0 %v875
    %v910 = vpop.xlane.xlu0 %909
    %911 = vadd.xlane.f32.xlu0 %v876
    %v912 = vpop.xlane.xlu0 %911
    %913 = vadd.xlane.f32.xlu0 %v877
    %v914 = vpop.xlane.xlu0 %913
    %915 = vadd.xlane.f32.xlu0 %v878
    %v916 = vpop.xlane.xlu0 %915
    %917 = vadd.xlane.f32.xlu0 %v879
    %v918 = vpop.xlane.xlu0 %917
    %919 = vadd.xlane.f32.xlu0 %v880
    %v920 = vpop.xlane.xlu0 %919
    %921 = vadd.xlane.f32.xlu0 %v881
    %v922 = vpop.xlane.xlu0 %921
    %923 = vadd.xlane.f32.xlu0 %v882
    %v924 = vpop.xlane.xlu0 %923
    %925 = vadd.xlane.f32.xlu0 %v883
    %v926 = vpop.xlane.xlu0 %925
    %927 = vadd.xlane.f32.xlu0 %v884
    %v928 = vpop.xlane.xlu0 %927
    %929 = vadd.xlane.f32.xlu0 %v885
    %v930 = vpop.xlane.xlu0 %929
    %931 = vadd.xlane.f32.xlu0 %v886
    %v932 = vpop.xlane.xlu0 %931
    %933 = vadd.xlane.f32.xlu0 %v887
    %v934 = vpop.xlane.xlu0 %933
    %935 = vadd.xlane.f32.xlu0 %v888
    %v936 = vpop.xlane.xlu0 %935
    %937 = vadd.xlane.f32.xlu0 %v889
    %v938 = vpop.xlane.xlu0 %937
    %939 = vadd.xlane.f32.xlu0 %v890
    %v940 = vpop.xlane.xlu0 %939
    %941 = vadd.xlane.f32.xlu0 %v891
    %v942 = vpop.xlane.xlu0 %941
    %943 = vadd.xlane.f32.xlu0 %v892
    %v944 = vpop.xlane.xlu0 %943
    %945 = vadd.xlane.f32.xlu0 %v893
    %v946 = vpop.xlane.xlu0 %945
    %947 = vadd.xlane.f32.xlu0 %v894
    %v948 = vpop.xlane.xlu0 %947
    %949 = vadd.xlane.f32.xlu0 %v895
    %v950 = vpop.xlane.xlu0 %949
    %951 = vadd.xlane.f32.xlu0 %v896
    %v952 = vpop.xlane.xlu0 %951
    %953 = vadd.xlane.f32.xlu0 %v897
    %v954 = vpop.xlane.xlu0 %953
    %955 = vadd.xlane.f32.xlu0 %v898
    %v956 = vpop.xlane.xlu0 %955
    %957 = vadd.xlane.f32.xlu0 %v899
    %v958 = vpop.xlane.xlu0 %957
    %959 = vadd.xlane.f32.xlu0 %v900
    %v960 = vpop.xlane.xlu0 %959
    %961 = vadd.xlane.f32.xlu0 %v901
    %v962 = vpop.xlane.xlu0 %961
    %963 = vadd.xlane.f32.xlu0 %v902
    %v964 = vpop.xlane.xlu0 %963
    %965 = vadd.xlane.f32.xlu0 %v903
    %v966 = vpop.xlane.xlu0 %965
    %967 = vadd.xlane.f32.xlu0 %v904
    %v968 = vpop.xlane.xlu0 %967
    %v969 = vmax.f32 %v906, 1e-24
    %v970 = vmax.f32 %v908, 1e-24
    %v971 = vmax.f32 %v910, 1e-24
    %v972 = vmax.f32 %v912, 1e-24
    %v973 = vmax.f32 %v914, 1e-24
    %v974 = vmax.f32 %v916, 1e-24
    %v975 = vmax.f32 %v918, 1e-24
    %v976 = vmax.f32 %v920, 1e-24
    %v977 = vmax.f32 %v922, 1e-24
    %v978 = vmax.f32 %v924, 1e-24
    %v979 = vmax.f32 %v926, 1e-24
    %v980 = vmax.f32 %v928, 1e-24
    %v981 = vmax.f32 %v930, 1e-24
    %v982 = vmax.f32 %v932, 1e-24
    %v983 = vmax.f32 %v934, 1e-24
    %v984 = vmax.f32 %v936, 1e-24
    %v985 = vmax.f32 %v938, 1e-24
    %v986 = vmax.f32 %v940, 1e-24
    %v987 = vmax.f32 %v942, 1e-24
    %v988 = vmax.f32 %v944, 1e-24
    %v989 = vmax.f32 %v946, 1e-24
    %v990 = vmax.f32 %v948, 1e-24
    %v991 = vmax.f32 %v950, 1e-24
    %v992 = vmax.f32 %v952, 1e-24
    %v993 = vmax.f32 %v954, 1e-24
    %v994 = vmax.f32 %v956, 1e-24
    %v995 = vmax.f32 %v958, 1e-24
    %v996 = vmax.f32 %v960, 1e-24
    %v997 = vmax.f32 %v962, 1e-24
    %v998 = vmax.f32 %v964, 1e-24
    %v999 = vmax.f32 %v966, 1e-24
    %v1000 = vmax.f32 %v968, 1e-24
    %v1001 = vrsqrt.pop %v969
    %v1002 = vrsqrt.pop %v970
    %v1003 = vrsqrt.pop %v971
    %v1004 = vrsqrt.pop %v972
    %v1005 = vrsqrt.pop %v973
    %v1006 = vrsqrt.pop %v974
    %v1007 = vrsqrt.pop %v975
    %v1008 = vrsqrt.pop %v976
    %v1009 = vrsqrt.pop %v977
    %v1010 = vrsqrt.pop %v978
    %v1011 = vrsqrt.pop %v979
    %v1012 = vrsqrt.pop %v980
    %v1013 = vrsqrt.pop %v981
    %v1014 = vrsqrt.pop %v982
    %v1015 = vrsqrt.pop %v983
    %v1016 = vrsqrt.pop %v984
    %v1017 = vrsqrt.pop %v985
    %v1018 = vrsqrt.pop %v986
    %v1019 = vrsqrt.pop %v987
    %v1020 = vrsqrt.pop %v988
    %v1021 = vrsqrt.pop %v989
    %v1022 = vrsqrt.pop %v990
    %v1023 = vrsqrt.pop %v991
    %v1024 = vrsqrt.pop %v992
    %v1025 = vrsqrt.pop %v993
    %v1026 = vrsqrt.pop %v994
    %v1027 = vrsqrt.pop %v995
    %v1028 = vrsqrt.pop %v996
    %v1029 = vrsqrt.pop %v997
    %v1030 = vrsqrt.pop %v998
    %v1031 = vrsqrt.pop %v999
    %v1032 = vrsqrt.pop %v1000
    %v1033 = vmul.f32 %v841, %v1001
    %v1034 = vmul.f32 %v842, %v1002
    %v1035 = vmul.f32 %v843, %v1003
    %v1036 = vmul.f32 %v844, %v1004
    %v1037 = vmul.f32 %v845, %v1005
    %v1038 = vmul.f32 %v846, %v1006
    %v1039 = vmul.f32 %v847, %v1007
    %v1040 = vmul.f32 %v848, %v1008
    %v1041 = vmul.f32 %v849, %v1009
    %v1042 = vmul.f32 %v850, %v1010
    %v1043 = vmul.f32 %v851, %v1011
    %v1044 = vmul.f32 %v852, %v1012
    %v1045 = vmul.f32 %v853, %v1013
    %v1046 = vmul.f32 %v854, %v1014
    %v1047 = vmul.f32 %v855, %v1015
    %v1048 = vmul.f32 %v856, %v1016
    %v1049 = vmul.f32 %v857, %v1017
    %v1050 = vmul.f32 %v858, %v1018
    %v1051 = vmul.f32 %v859, %v1019
    %v1052 = vmul.f32 %v860, %v1020
    %v1053 = vmul.f32 %v861, %v1021
    %v1054 = vmul.f32 %v862, %v1022
    %v1055 = vmul.f32 %v863, %v1023
    %v1056 = vmul.f32 %v864, %v1024
    %v1057 = vmul.f32 %v865, %v1025
    %v1058 = vmul.f32 %v866, %v1026
    %v1059 = vmul.f32 %v867, %v1027
    %v1060 = vmul.f32 %v868, %v1028
    %v1061 = vmul.f32 %v869, %v1029
    %v1062 = vmul.f32 %v870, %v1030
    %v1063 = vmul.f32 %v871, %v1031
    %v1064 = vmul.f32 %v872, %v1032
    %1065 = vst [vmem:[%s4] sm:$0xff] %v1033
    %1066 = vst [vmem:[%s4 + $0x8] sm:$0xff] %v1034
    %1067 = vst [vmem:[%s4 + $0x10] sm:$0xff] %v1035
    %1068 = vst [vmem:[%s4 + $0x18] sm:$0xff] %v1036
    %1069 = vst [vmem:[%s4 + $0x20] sm:$0xff] %v1037
    %1070 = vst [vmem:[%s4 + $0x28] sm:$0xff] %v1038
    %1071 = vst [vmem:[%s4 + $0x30] sm:$0xff] %v1039
    %1072 = vst [vmem:[%s4 + $0x38] sm:$0xff] %v1040
    %1073 = vst [vmem:[%s4 + $0x40] sm:$0xff] %v1041
    %1074 = vst [vmem:[%s4 + $0x48] sm:$0xff] %v1042
    %1075 = vst [vmem:[%s4 + $0x50] sm:$0xff] %v1043
    %1076 = vst [vmem:[%s4 + $0x58] sm:$0xff] %v1044
    %1077 = vst [vmem:[%s4 + $0x60] sm:$0xff] %v1045
    %1078 = vst [vmem:[%s4 + $0x68] sm:$0xff] %v1046
    %1079 = vst [vmem:[%s4 + $0x70] sm:$0xff] %v1047
    %1080 = vst [vmem:[%s4 + $0x78] sm:$0xff] %v1048
    %1081 = vst [vmem:[%s4 + $0x80] sm:$0xff] %v1049
    %1082 = vst [vmem:[%s4 + $0x88] sm:$0xff] %v1050
    %1083 = vst [vmem:[%s4 + $0x90] sm:$0xff] %v1051
    %1084 = vst [vmem:[%s4 + $0x98] sm:$0xff] %v1052
    %1085 = vst [vmem:[%s4 + $0xa0] sm:$0xff] %v1053
    %1086 = vst [vmem:[%s4 + $0xa8] sm:$0xff] %v1054
    %1087 = vst [vmem:[%s4 + $0xb0] sm:$0xff] %v1055
    %1088 = vst [vmem:[%s4 + $0xb8] sm:$0xff] %v1056
    %1089 = vst [vmem:[%s4 + $0xc0] sm:$0xff] %v1057
    %1090 = vst [vmem:[%s4 + $0xc8] sm:$0xff] %v1058
    %1091 = vst [vmem:[%s4 + $0xd0] sm:$0xff] %v1059
    %1092 = vst [vmem:[%s4 + $0xd8] sm:$0xff] %v1060
    %1093 = vst [vmem:[%s4 + $0xe0] sm:$0xff] %v1061
    %1094 = vst [vmem:[%s4 + $0xe8] sm:$0xff] %v1062
    %1095 = vst [vmem:[%s4 + $0xf0] sm:$0xff] %v1063
    %1096 = vst [vmem:[%s4 + $0xf8] sm:$0xff] %v1064
  $region25: #{sage_encoder_forward.3} parent=0 // pred_fallthru
    _
  // Predicated region
  $region26: #{sage_encoder_forward.3} parent=0 // pred_check
    _
  $region27: #{sage_encoder_forward.3} parent=0 // pred_check_branch
    %1098 = sbr.rel (0) target = $region29
  $region28: #{sage_encoder_forward.3} parent=0 // pred_region
    _
  $region29: #{sage_encoder_forward.3} parent=0 // pred_fallthru
    _
  // Predicated region
  $region30: #{sage_encoder_forward.3} parent=0 // pred_check
    _
  $region31: #{sage_encoder_forward.3} parent=0 // pred_check_branch
    %1100 = sbr.rel (0) target = $region33
  $region32: #{sage_encoder_forward.3} parent=0 // pred_region
    _
  $region33: #{sage_encoder_forward.3} parent=0 // pred_fallthru
    _

// kernel: sage_encoder_forward.2
$region0: #{sage_encoder_forward.2}
  #allocation0 [shape = 'u32[]', space=smem, size = 0x4, offset = 0x4, fixed_abs, tag = 'smem constant byte address 0x4 - core index']
  #allocation1 [shape = 'u32[144,128]{1,0:T(1,128)}', space=vmem, size = 0x12000, scoped, tag = 'internal scratch']
  #allocation2 [shape = 'f32[256,128]{1,0:T(8,128)}', space=vmem, size = 0x20000, scoped, tag = 'scratch operand']
  %s0 = inlined_call_operand.vmem [shape: s8[256,256], index: 0, kind: input, shape index: {}]
  %s1 = inlined_call_operand.vmem [shape: f32[256,128], index: 1, kind: input, shape index: {}]
  %s2 = inlined_call_operand.vmem [shape: f32[256,1], index: 2, kind: input, shape index: {}]
  %s3 = inlined_call_operand.vmem [shape: f32[256,128], index: 3, kind: input, shape index: {}]
  %s4 = inlined_call_operand.vmem [shape: f32[256,128], index: 4, kind: output, shape index: {}]
  %s5 = sld [smem:[#allocation0]]
  $region34: #{sage_encoder_forward.2} parent=0
    _
  %s7 = ssub.s32 1, %s5
  %s8 = scalar_select 0, %s7, %s5
  // Predicated region
  $region2: #{sage_encoder_forward.2} parent=0 // pred_check
    _
  $region3: #{sage_encoder_forward.2} parent=0 // pred_check_branch
    %10 = sbr.rel (0) target = $region5
  $region4: #{sage_encoder_forward.2} parent=0 // pred_region
    _
  $region5: #{sage_encoder_forward.2} parent=0 // pred_fallthru
    _
  // Predicated region
  $region6: #{sage_encoder_forward.2} parent=0 // pred_check
    _
  $region7: #{sage_encoder_forward.2} parent=0 // pred_check_branch
    %12 = sbr.rel (0) target = $region9
  $region8: #{sage_encoder_forward.2} parent=0 // pred_region
    _
  $region9: #{sage_encoder_forward.2} parent=0 // pred_fallthru
    _
  // Predicated region
  $region10: #{sage_encoder_forward.2} parent=0 // pred_check
    _
  $region11: #{sage_encoder_forward.2} parent=0 // pred_check_branch
    %14 = sbr.rel (0) target = $region13
  $region12: #{sage_encoder_forward.2} parent=0 // pred_region
    _
  $region13: #{sage_encoder_forward.2} parent=0 // pred_fallthru
    _
  // Predicated region
  $region14: #{sage_encoder_forward.2} parent=0 // pred_check
    _
  $region15: #{sage_encoder_forward.2} parent=0 // pred_check_branch
    %16 = sbr.rel (0) target = $region17
  $region16: #{sage_encoder_forward.2} parent=0 // pred_region
    _
  $region17: #{sage_encoder_forward.2} parent=0 // pred_fallthru
    _
  %p17 = scmp.eq.s32.totalorder 0, 0
  // Predicated region
  $region18: #{sage_encoder_forward.2} parent=0 // pred_check
    %p18 = pneg %p17
  $region19: #{sage_encoder_forward.2} parent=0 // pred_check_branch
    %20 = sbr.rel (%p18) target = $region21
  $region20: #{sage_encoder_forward.2} parent=0 // pred_region
    %21 = vst [vmem:[#allocation2] sm:$0xff] 0.0
    %22 = vst [vmem:[#allocation2 + $0x8] sm:$0xff] 0.0
    %23 = vst [vmem:[#allocation2 + $0x10] sm:$0xff] 0.0
    %24 = vst [vmem:[#allocation2 + $0x18] sm:$0xff] 0.0
    %25 = vst [vmem:[#allocation2 + $0x20] sm:$0xff] 0.0
    %26 = vst [vmem:[#allocation2 + $0x28] sm:$0xff] 0.0
    %27 = vst [vmem:[#allocation2 + $0x30] sm:$0xff] 0.0
    %28 = vst [vmem:[#allocation2 + $0x38] sm:$0xff] 0.0
    %29 = vst [vmem:[#allocation2 + $0x40] sm:$0xff] 0.0
    %30 = vst [vmem:[#allocation2 + $0x48] sm:$0xff] 0.0
    %31 = vst [vmem:[#allocation2 + $0x50] sm:$0xff] 0.0
    %32 = vst [vmem:[#allocation2 + $0x58] sm:$0xff] 0.0
    %33 = vst [vmem:[#allocation2 + $0x60] sm:$0xff] 0.0
    %34 = vst [vmem:[#allocation2 + $0x68] sm:$0xff] 0.0
    %35 = vst [vmem:[#allocation2 + $0x70] sm:$0xff] 0.0
    %36 = vst [vmem:[#allocation2 + $0x78] sm:$0xff] 0.0
    %37 = vst [vmem:[#allocation2 + $0x80] sm:$0xff] 0.0
    %38 = vst [vmem:[#allocation2 + $0x88] sm:$0xff] 0.0
    %39 = vst [vmem:[#allocation2 + $0x90] sm:$0xff] 0.0
    %40 = vst [vmem:[#allocation2 + $0x98] sm:$0xff] 0.0
    %41 = vst [vmem:[#allocation2 + $0xa0] sm:$0xff] 0.0
    %42 = vst [vmem:[#allocation2 + $0xa8] sm:$0xff] 0.0
    %43 = vst [vmem:[#allocation2 + $0xb0] sm:$0xff] 0.0
    %44 = vst [vmem:[#allocation2 + $0xb8] sm:$0xff] 0.0
    %45 = vst [vmem:[#allocation2 + $0xc0] sm:$0xff] 0.0
    %46 = vst [vmem:[#allocation2 + $0xc8] sm:$0xff] 0.0
    %47 = vst [vmem:[#allocation2 + $0xd0] sm:$0xff] 0.0
    %48 = vst [vmem:[#allocation2 + $0xd8] sm:$0xff] 0.0
    %49 = vst [vmem:[#allocation2 + $0xe0] sm:$0xff] 0.0
    %50 = vst [vmem:[#allocation2 + $0xe8] sm:$0xff] 0.0
    %51 = vst [vmem:[#allocation2 + $0xf0] sm:$0xff] 0.0
    %52 = vst [vmem:[#allocation2 + $0xf8] sm:$0xff] 0.0
  $region21: #{sage_encoder_forward.2} parent=0 // pred_fallthru
    _
  %v53 = vld [vmem:[%s0] sm:$0xff]
  %v54 = vld [vmem:[%s0 + $0x8] sm:$0xff]
  %v55 = vld [vmem:[%s0 + $0x10] sm:$0xff]
  %v56 = vld [vmem:[%s0 + $0x18] sm:$0xff]
  %v57 = vld [vmem:[%s0 + $0x20] sm:$0xff]
  %v58 = vld [vmem:[%s0 + $0x28] sm:$0xff]
  %v59 = vld [vmem:[%s0 + $0x30] sm:$0xff]
  %v60 = vld [vmem:[%s0 + $0x38] sm:$0xff]
  %v61 = vld [vmem:[%s0 + $0x40] sm:$0xff]
  %v62 = vld [vmem:[%s0 + $0x48] sm:$0xff]
  %v63 = vld [vmem:[%s0 + $0x50] sm:$0xff]
  %v64 = vld [vmem:[%s0 + $0x58] sm:$0xff]
  %v65 = vld [vmem:[%s0 + $0x60] sm:$0xff]
  %v66 = vld [vmem:[%s0 + $0x68] sm:$0xff]
  %v67 = vld [vmem:[%s0 + $0x70] sm:$0xff]
  %v68 = vld [vmem:[%s0 + $0x78] sm:$0xff]
  %v69 = vunpack.c.0.s8 %v53
  %v70 = vunpack.c.0.s8 %v54
  %v71 = vunpack.c.1.s8 %v53
  %v72 = vunpack.c.1.s8 %v54
  %v73 = vunpack.c.2.s8 %v53
  %v74 = vunpack.c.2.s8 %v54
  %v75 = vunpack.c.3.s8 %v53
  %v76 = vunpack.c.3.s8 %v54
  %v77 = vunpack.c.0.s8 %v55
  %v78 = vunpack.c.0.s8 %v56
  %v79 = vunpack.c.1.s8 %v55
  %v80 = vunpack.c.1.s8 %v56
  %v81 = vunpack.c.2.s8 %v55
  %v82 = vunpack.c.2.s8 %v56
  %v83 = vunpack.c.3.s8 %v55
  %v84 = vunpack.c.3.s8 %v56
  %v85 = vunpack.c.0.s8 %v57
  %v86 = vunpack.c.0.s8 %v58
  %v87 = vunpack.c.1.s8 %v57
  %v88 = vunpack.c.1.s8 %v58
  %v89 = vunpack.c.2.s8 %v57
  %v90 = vunpack.c.2.s8 %v58
  %v91 = vunpack.c.3.s8 %v57
  %v92 = vunpack.c.3.s8 %v58
  %v93 = vunpack.c.0.s8 %v59
  %v94 = vunpack.c.0.s8 %v60
  %v95 = vunpack.c.1.s8 %v59
  %v96 = vunpack.c.1.s8 %v60
  %v97 = vunpack.c.2.s8 %v59
  %v98 = vunpack.c.2.s8 %v60
  %v99 = vunpack.c.3.s8 %v59
  %v100 = vunpack.c.3.s8 %v60
  %v101 = vunpack.c.0.s8 %v61
  %v102 = vunpack.c.0.s8 %v62
  %v103 = vunpack.c.1.s8 %v61
  %v104 = vunpack.c.1.s8 %v62
  %v105 = vunpack.c.2.s8 %v61
  %v106 = vunpack.c.2.s8 %v62
  %v107 = vunpack.c.3.s8 %v61
  %v108 = vunpack.c.3.s8 %v62
  %v109 = vunpack.c.0.s8 %v63
  %v110 = vunpack.c.0.s8 %v64
  %v111 = vunpack.c.1.s8 %v63
  %v112 = vunpack.c.1.s8 %v64
  %v113 = vunpack.c.2.s8 %v63
  %v114 = vunpack.c.2.s8 %v64
  %v115 = vunpack.c.3.s8 %v63
  %v116 = vunpack.c.3.s8 %v64
  %v117 = vunpack.c.0.s8 %v65
  %v118 = vunpack.c.0.s8 %v66
  %v119 = vunpack.c.1.s8 %v65
  %v120 = vunpack.c.1.s8 %v66
  %v121 = vunpack.c.2.s8 %v65
  %v122 = vunpack.c.2.s8 %v66
  %v123 = vunpack.c.3.s8 %v65
  %v124 = vunpack.c.3.s8 %v66
  %v125 = vunpack.c.0.s8 %v67
  %v126 = vunpack.c.0.s8 %v68
  %v127 = vunpack.c.1.s8 %v67
  %v128 = vunpack.c.1.s8 %v68
  %v129 = vunpack.c.2.s8 %v67
  %v130 = vunpack.c.2.s8 %v68
  %v131 = vunpack.c.3.s8 %v67
  %v132 = vunpack.c.3.s8 %v68
  %v133 = vcvt.s32.f32 %v69
  %v134 = vcvt.s32.f32 %v70
  %v135 = vcvt.s32.f32 %v71
  %v136 = vcvt.s32.f32 %v72
  %v137 = vcvt.s32.f32 %v73
  %v138 = vcvt.s32.f32 %v74
  %v139 = vcvt.s32.f32 %v75
  %v140 = vcvt.s32.f32 %v76
  %v141 = vcvt.s32.f32 %v77
  %v142 = vcvt.s32.f32 %v78
  %v143 = vcvt.s32.f32 %v79
  %v144 = vcvt.s32.f32 %v80
  %v145 = vcvt.s32.f32 %v81
  %v146 = vcvt.s32.f32 %v82
  %v147 = vcvt.s32.f32 %v83
  %v148 = vcvt.s32.f32 %v84
  %v149 = vcvt.s32.f32 %v85
  %v150 = vcvt.s32.f32 %v86
  %v151 = vcvt.s32.f32 %v87
  %v152 = vcvt.s32.f32 %v88
  %v153 = vcvt.s32.f32 %v89
  %v154 = vcvt.s32.f32 %v90
  %v155 = vcvt.s32.f32 %v91
  %v156 = vcvt.s32.f32 %v92
  %v157 = vcvt.s32.f32 %v93
  %v158 = vcvt.s32.f32 %v94
  %v159 = vcvt.s32.f32 %v95
  %v160 = vcvt.s32.f32 %v96
  %v161 = vcvt.s32.f32 %v97
  %v162 = vcvt.s32.f32 %v98
  %v163 = vcvt.s32.f32 %v99
  %v164 = vcvt.s32.f32 %v100
  %v165 = vcvt.s32.f32 %v101
  %v166 = vcvt.s32.f32 %v102
  %v167 = vcvt.s32.f32 %v103
  %v168 = vcvt.s32.f32 %v104
  %v169 = vcvt.s32.f32 %v105
  %v170 = vcvt.s32.f32 %v106
  %v171 = vcvt.s32.f32 %v107
  %v172 = vcvt.s32.f32 %v108
  %v173 = vcvt.s32.f32 %v109
  %v174 = vcvt.s32.f32 %v110
  %v175 = vcvt.s32.f32 %v111
  %v176 = vcvt.s32.f32 %v112
  %v177 = vcvt.s32.f32 %v113
  %v178 = vcvt.s32.f32 %v114
  %v179 = vcvt.s32.f32 %v115
  %v180 = vcvt.s32.f32 %v116
  %v181 = vcvt.s32.f32 %v117
  %v182 = vcvt.s32.f32 %v118
  %v183 = vcvt.s32.f32 %v119
  %v184 = vcvt.s32.f32 %v120
  %v185 = vcvt.s32.f32 %v121
  %v186 = vcvt.s32.f32 %v122
  %v187 = vcvt.s32.f32 %v123
  %v188 = vcvt.s32.f32 %v124
  %v189 = vcvt.s32.f32 %v125
  %v190 = vcvt.s32.f32 %v126
  %v191 = vcvt.s32.f32 %v127
  %v192 = vcvt.s32.f32 %v128
  %v193 = vcvt.s32.f32 %v129
  %v194 = vcvt.s32.f32 %v130
  %v195 = vcvt.s32.f32 %v131
  %v196 = vcvt.s32.f32 %v132
  %v197 = vld [vmem:[#allocation2] sm:$0xff]
  %v198 = vld [vmem:[#allocation2 + $0x8] sm:$0xff]
  %v199 = vld [vmem:[#allocation2 + $0x10] sm:$0xff]
  %v200 = vld [vmem:[#allocation2 + $0x18] sm:$0xff]
  %v201 = vld [vmem:[#allocation2 + $0x20] sm:$0xff]
  %v202 = vld [vmem:[#allocation2 + $0x28] sm:$0xff]
  %v203 = vld [vmem:[#allocation2 + $0x30] sm:$0xff]
  %v204 = vld [vmem:[#allocation2 + $0x38] sm:$0xff]
  %v205 = vld [vmem:[#allocation2 + $0x40] sm:$0xff]
  %v206 = vld [vmem:[#allocation2 + $0x48] sm:$0xff]
  %v207 = vld [vmem:[#allocation2 + $0x50] sm:$0xff]
  %v208 = vld [vmem:[#allocation2 + $0x58] sm:$0xff]
  %v209 = vld [vmem:[#allocation2 + $0x60] sm:$0xff]
  %v210 = vld [vmem:[#allocation2 + $0x68] sm:$0xff]
  %v211 = vld [vmem:[#allocation2 + $0x70] sm:$0xff]
  %v212 = vld [vmem:[#allocation2 + $0x78] sm:$0xff]
  %v213 = vld [vmem:[#allocation2 + $0x80] sm:$0xff]
  %v214 = vld [vmem:[#allocation2 + $0x88] sm:$0xff]
  %v215 = vld [vmem:[#allocation2 + $0x90] sm:$0xff]
  %v216 = vld [vmem:[#allocation2 + $0x98] sm:$0xff]
  %v217 = vld [vmem:[#allocation2 + $0xa0] sm:$0xff]
  %v218 = vld [vmem:[#allocation2 + $0xa8] sm:$0xff]
  %v219 = vld [vmem:[#allocation2 + $0xb0] sm:$0xff]
  %v220 = vld [vmem:[#allocation2 + $0xb8] sm:$0xff]
  %v221 = vld [vmem:[#allocation2 + $0xc0] sm:$0xff]
  %v222 = vld [vmem:[#allocation2 + $0xc8] sm:$0xff]
  %v223 = vld [vmem:[#allocation2 + $0xd0] sm:$0xff]
  %v224 = vld [vmem:[#allocation2 + $0xd8] sm:$0xff]
  %v225 = vld [vmem:[#allocation2 + $0xe0] sm:$0xff]
  %v226 = vld [vmem:[#allocation2 + $0xe8] sm:$0xff]
  %v227 = vld [vmem:[#allocation2 + $0xf0] sm:$0xff]
  %v228 = vld [vmem:[#allocation2 + $0xf8] sm:$0xff]
  %v229 = vld [vmem:[%s1] sm:$0xff]
  %v230 = vld [vmem:[%s1 + $0x8] sm:$0xff]
  %v231 = vld [vmem:[%s1 + $0x10] sm:$0xff]
  %v232 = vld [vmem:[%s1 + $0x18] sm:$0xff]
  %v233 = vld [vmem:[%s1 + $0x20] sm:$0xff]
  %v234 = vld [vmem:[%s1 + $0x28] sm:$0xff]
  %v235 = vld [vmem:[%s1 + $0x30] sm:$0xff]
  %v236 = vld [vmem:[%s1 + $0x38] sm:$0xff]
  %v237 = vld [vmem:[%s1 + $0x40] sm:$0xff]
  %v238 = vld [vmem:[%s1 + $0x48] sm:$0xff]
  %v239 = vld [vmem:[%s1 + $0x50] sm:$0xff]
  %v240 = vld [vmem:[%s1 + $0x58] sm:$0xff]
  %v241 = vld [vmem:[%s1 + $0x60] sm:$0xff]
  %v242 = vld [vmem:[%s1 + $0x68] sm:$0xff]
  %v243 = vld [vmem:[%s1 + $0x70] sm:$0xff]
  %v244 = vld [vmem:[%s1 + $0x78] sm:$0xff]
  %v245 = vld [vmem:[%s1 + $0x80] sm:$0xff]
  %v246 = vld [vmem:[%s1 + $0x88] sm:$0xff]
  %v247 = vld [vmem:[%s1 + $0x90] sm:$0xff]
  %v248 = vld [vmem:[%s1 + $0x98] sm:$0xff]
  %v249 = vld [vmem:[%s1 + $0xa0] sm:$0xff]
  %v250 = vld [vmem:[%s1 + $0xa8] sm:$0xff]
  %v251 = vld [vmem:[%s1 + $0xb0] sm:$0xff]
  %v252 = vld [vmem:[%s1 + $0xb8] sm:$0xff]
  %v253 = vld [vmem:[%s1 + $0xc0] sm:$0xff]
  %v254 = vld [vmem:[%s1 + $0xc8] sm:$0xff]
  %v255 = vld [vmem:[%s1 + $0xd0] sm:$0xff]
  %v256 = vld [vmem:[%s1 + $0xd8] sm:$0xff]
  %v257 = vld [vmem:[%s1 + $0xe0] sm:$0xff]
  %v258 = vld [vmem:[%s1 + $0xe8] sm:$0xff]
  %v259 = vld [vmem:[%s1 + $0xf0] sm:$0xff]
  %v260 = vld [vmem:[%s1 + $0xf8] sm:$0xff]
  %261 = vmatprep.subr.mxu0 0.0
  %262 = vmatpush1.msra.mxu0 %v229
  %263 = vmatprep.subr.mxu0 0.0
  %264 = vmatpush1.msra.mxu0 %v230
  %265 = vmatprep.subr.mxu0 0.0
  %266 = vmatpush1.msra.mxu0 %v231
  %267 = vmatprep.subr.mxu0 0.0
  %268 = vmatpush1.msra.mxu0 %v232
  %269 = vmatprep.subr.mxu0 0.0
  %270 = vmatpush1.msra.mxu0 %v233
  %271 = vmatprep.subr.mxu0 0.0
  %272 = vmatpush1.msra.mxu0 %v234
  %273 = vmatprep.subr.mxu0 0.0
  %274 = vmatpush1.msra.mxu0 %v235
  %275 = vmatprep.subr.mxu0 0.0
  %276 = vmatpush1.msra.mxu0 %v236
  %277 = vmatprep.subr.mxu0 0.0
  %278 = vmatpush1.msra.mxu0 %v237
  %279 = vmatprep.subr.mxu0 0.0
  %280 = vmatpush1.msra.mxu0 %v238
  %281 = vmatprep.subr.mxu0 0.0
  %282 = vmatpush1.msra.mxu0 %v239
  %283 = vmatprep.subr.mxu0 0.0
  %284 = vmatpush1.msra.mxu0 %v240
  %285 = vmatprep.subr.mxu0 0.0
  %286 = vmatpush1.msra.mxu0 %v241
  %287 = vmatprep.subr.mxu0 0.0
  %288 = vmatpush1.msra.mxu0 %v242
  %289 = vmatprep.subr.mxu0 0.0
  %290 = vmatpush1.msra.mxu0 %v243
  %291 = vmatprep.subr.mxu0 0.0
  %292 = vmatpush1.msra.mxu0 %v244
  %293 = vmatprep.subr.mxu0 0.0
  %294 = vmatpush1.msra.mxu0 %v245
  %295 = vmatprep.subr.mxu0 0.0
  %296 = vmatpush1.msra.mxu0 %v246
  %297 = vmatprep.subr.mxu0 0.0
  %298 = vmatpush1.msra.mxu0 %v247
  %299 = vmatprep.subr.mxu0 0.0
  %300 = vmatpush1.msra.mxu0 %v248
  %301 = vmatprep.subr.mxu0 0.0
  %302 = vmatpush1.msra.mxu0 %v249
  %303 = vmatprep.subr.mxu0 0.0
  %304 = vmatpush1.msra.mxu0 %v250
  %305 = vmatprep.subr.mxu0 0.0
  %306 = vmatpush1.msra.mxu0 %v251
  %307 = vmatprep.subr.mxu0 0.0
  %308 = vmatpush1.msra.mxu0 %v252
  %309 = vmatprep.subr.mxu0 0.0
  %310 = vmatpush1.msra.mxu0 %v253
  %311 = vmatprep.subr.mxu0 0.0
  %312 = vmatpush1.msra.mxu0 %v254
  %313 = vmatprep.subr.mxu0 0.0
  %314 = vmatpush1.msra.mxu0 %v255
  %315 = vmatprep.subr.mxu0 0.0
  %316 = vmatpush1.msra.mxu0 %v256
  %317 = vmatprep.subr.mxu0 0.0
  %318 = vmatpush1.msra.mxu0 %v257
  %319 = vmatprep.subr.mxu0 0.0
  %320 = vmatpush1.msra.mxu0 %v258
  %321 = vmatprep.subr.mxu0 0.0
  %322 = vmatpush1.msra.mxu0 %v259
  %323 = vmatprep.subr.mxu0 0.0
  %324 = vmatpush1.msra.mxu0 %v260
  %325 = vmatprep.mubr.f32.mxu0 %v134
  %326 = vmatmul.mubr.f32.gmra.mrb[0].mxu0 %v133
  %v327 = vpop.f32.mrb[0].mxu0
  %v328 = vadd.f32 0.0, %v327
  %v329 = vpop.f32.mrb[0].mxu0
  %330 = vmatprep.mubr.f32.mxu0 %v136
  %331 = vmatmul.mubr.f32.gmra.mrb[0].mxu0 %v135
  %v332 = vpop.f32.mrb[0].mxu0
  %v333 = vadd.f32 0.0, %v332
  %v334 = vpop.f32.mrb[0].mxu0
  %335 = vmatprep.mubr.f32.mxu0 %v138
  %336 = vmatmul.mubr.f32.gmra.mrb[0].mxu0 %v137
  %v337 = vpop.f32.mrb[0].mxu0
  %v338 = vadd.f32 0.0, %v337
  %v339 = vpop.f32.mrb[0].mxu0
  %340 = vmatprep.mubr.f32.mxu0 %v140
  %341 = vmatmul.mubr.f32.gmra.mrb[0].mxu0 %v139
  %v342 = vpop.f32.mrb[0].mxu0
  %v343 = vadd.f32 0.0, %v342
  %v344 = vpop.f32.mrb[0].mxu0
  %345 = vmatprep.mubr.f32.mxu0 %v142
  %346 = vmatmul.mubr.f32.gmra.mrb[0].mxu0 %v141
  %v347 = vpop.f32.mrb[0].mxu0
  %v348 = vadd.f32 0.0, %v347
  %v349 = vpop.f32.mrb[0].mxu0
  %350 = vmatprep.mubr.f32.mxu0 %v144
  %351 = vmatmul.mubr.f32.gmra.mrb[0].mxu0 %v143
  %v352 = vpop.f32.mrb[0].mxu0
  %v353 = vadd.f32 0.0, %v352
  %v354 = vpop.f32.mrb[0].mxu0
  %355 = vmatprep.mubr.f32.mxu0 %v146
  %356 = vmatmul.mubr.f32.gmra.mrb[0].mxu0 %v145
  %v357 = vpop.f32.mrb[0].mxu0
  %v358 = vadd.f32 0.0, %v357
  %v359 = vpop.f32.mrb[0].mxu0
  %360 = vmatprep.mubr.f32.mxu0 %v148
  %361 = vmatmul.mubr.f32.gmra.mrb[0].mxu0 %v147
  %v362 = vpop.f32.mrb[0].mxu0
  %v363 = vadd.f32 0.0, %v362
  %v364 = vpop.f32.mrb[0].mxu0
  %365 = vmatprep.mubr.f32.mxu0 %v150
  %366 = vmatmul.mubr.f32.gmra.mrb[0].mxu0 %v149
  %v367 = vpop.f32.mrb[0].mxu0
  %v368 = vadd.f32 0.0, %v367
  %v369 = vpop.f32.mrb[0].mxu0
  %370 = vmatprep.mubr.f32.mxu0 %v152
  %371 = vmatmul.mubr.f32.gmra.mrb[0].mxu0 %v151
  %v372 = vpop.f32.mrb[0].mxu0
  %v373 = vadd.f32 0.0, %v372
  %v374 = vpop.f32.mrb[0].mxu0
  %375 = vmatprep.mubr.f32.mxu0 %v154
  %376 = vmatmul.mubr.f32.gmra.mrb[0].mxu0 %v153
  %v377 = vpop.f32.mrb[0].mxu0
  %v378 = vadd.f32 0.0, %v377
  %v379 = vpop.f32.mrb[0].mxu0
  %380 = vmatprep.mubr.f32.mxu0 %v156
  %381 = vmatmul.mubr.f32.gmra.mrb[0].mxu0 %v155
  %v382 = vpop.f32.mrb[0].mxu0
  %v383 = vadd.f32 0.0, %v382
  %v384 = vpop.f32.mrb[0].mxu0
  %385 = vmatprep.mubr.f32.mxu0 %v158
  %386 = vmatmul.mubr.f32.gmra.mrb[0].mxu0 %v157
  %v387 = vpop.f32.mrb[0].mxu0
  %v388 = vadd.f32 0.0, %v387
  %v389 = vpop.f32.mrb[0].mxu0
  %390 = vmatprep.mubr.f32.mxu0 %v160
  %391 = vmatmul.mubr.f32.gmra.mrb[0].mxu0 %v159
  %v392 = vpop.f32.mrb[0].mxu0
  %v393 = vadd.f32 0.0, %v392
  %v394 = vpop.f32.mrb[0].mxu0
  %395 = vmatprep.mubr.f32.mxu0 %v162
  %396 = vmatmul.mubr.f32.gmra.mrb[0].mxu0 %v161
  %v397 = vpop.f32.mrb[0].mxu0
  %v398 = vadd.f32 0.0, %v397
  %v399 = vpop.f32.mrb[0].mxu0
  %400 = vmatprep.mubr.f32.mxu0 %v164
  %401 = vmatmul.mubr.f32.gmra.mrb[0].mxu0 %v163
  %v402 = vpop.f32.mrb[0].mxu0
  %v403 = vadd.f32 0.0, %v402
  %v404 = vpop.f32.mrb[0].mxu0
  %405 = vmatprep.mubr.f32.mxu0 %v166
  %406 = vmatmul.mubr.f32.gmra.mrb[0].mxu0 %v165
  %v407 = vpop.f32.mrb[0].mxu0
  %v408 = vadd.f32 0.0, %v407
  %v409 = vpop.f32.mrb[0].mxu0
  %410 = vmatprep.mubr.f32.mxu0 %v168
  %411 = vmatmul.mubr.f32.gmra.mrb[0].mxu0 %v167
  %v412 = vpop.f32.mrb[0].mxu0
  %v413 = vadd.f32 0.0, %v412
  %v414 = vpop.f32.mrb[0].mxu0
  %415 = vmatprep.mubr.f32.mxu0 %v170
  %416 = vmatmul.mubr.f32.gmra.mrb[0].mxu0 %v169
  %v417 = vpop.f32.mrb[0].mxu0
  %v418 = vadd.f32 0.0, %v417
  %v419 = vpop.f32.mrb[0].mxu0
  %420 = vmatprep.mubr.f32.mxu0 %v172
  %421 = vmatmul.mubr.f32.gmra.mrb[0].mxu0 %v171
  %v422 = vpop.f32.mrb[0].mxu0
  %v423 = vadd.f32 0.0, %v422
  %v424 = vpop.f32.mrb[0].mxu0
  %425 = vmatprep.mubr.f32.mxu0 %v174
  %426 = vmatmul.mubr.f32.gmra.mrb[0].mxu0 %v173
  %v427 = vpop.f32.mrb[0].mxu0
  %v428 = vadd.f32 0.0, %v427
  %v429 = vpop.f32.mrb[0].mxu0
  %430 = vmatprep.mubr.f32.mxu0 %v176
  %431 = vmatmul.mubr.f32.gmra.mrb[0].mxu0 %v175
  %v432 = vpop.f32.mrb[0].mxu0
  %v433 = vadd.f32 0.0, %v432
  %v434 = vpop.f32.mrb[0].mxu0
  %435 = vmatprep.mubr.f32.mxu0 %v178
  %436 = vmatmul.mubr.f32.gmra.mrb[0].mxu0 %v177
  %v437 = vpop.f32.mrb[0].mxu0
  %v438 = vadd.f32 0.0, %v437
  %v439 = vpop.f32.mrb[0].mxu0
  %440 = vmatprep.mubr.f32.mxu0 %v180
  %441 = vmatmul.mubr.f32.gmra.mrb[0].mxu0 %v179
  %v442 = vpop.f32.mrb[0].mxu0
  %v443 = vadd.f32 0.0, %v442
  %v444 = vpop.f32.mrb[0].mxu0
  %445 = vmatprep.mubr.f32.mxu0 %v182
  %446 = vmatmul.mubr.f32.gmra.mrb[0].mxu0 %v181
  %v447 = vpop.f32.mrb[0].mxu0
  %v448 = vadd.f32 0.0, %v447
  %v449 = vpop.f32.mrb[0].mxu0
  %450 = vmatprep.mubr.f32.mxu0 %v184
  %451 = vmatmul.mubr.f32.gmra.mrb[0].mxu0 %v183
  %v452 = vpop.f32.mrb[0].mxu0
  %v453 = vadd.f32 0.0, %v452
  %v454 = vpop.f32.mrb[0].mxu0
  %455 = vmatprep.mubr.f32.mxu0 %v186
  %456 = vmatmul.mubr.f32.gmra.mrb[0].mxu0 %v185
  %v457 = vpop.f32.mrb[0].mxu0
  %v458 = vadd.f32 0.0, %v457
  %v459 = vpop.f32.mrb[0].mxu0
  %460 = vmatprep.mubr.f32.mxu0 %v188
  %461 = vmatmul.mubr.f32.gmra.mrb[0].mxu0 %v187
  %v462 = vpop.f32.mrb[0].mxu0
  %v463 = vadd.f32 0.0, %v462
  %v464 = vpop.f32.mrb[0].mxu0
  %465 = vmatprep.mubr.f32.mxu0 %v190
  %466 = vmatmul.mubr.f32.gmra.mrb[0].mxu0 %v189
  %v467 = vpop.f32.mrb[0].mxu0
  %v468 = vadd.f32 0.0, %v467
  %v469 = vpop.f32.mrb[0].mxu0
  %470 = vmatprep.mubr.f32.mxu0 %v192
  %471 = vmatmul.mubr.f32.gmra.mrb[0].mxu0 %v191
  %v472 = vpop.f32.mrb[0].mxu0
  %v473 = vadd.f32 0.0, %v472
  %v474 = vpop.f32.mrb[0].mxu0
  %475 = vmatprep.mubr.f32.mxu0 %v194
  %476 = vmatmul.mubr.f32.gmra.mrb[0].mxu0 %v193
  %v477 = vpop.f32.mrb[0].mxu0
  %v478 = vadd.f32 0.0, %v477
  %v479 = vpop.f32.mrb[0].mxu0
  %480 = vmatprep.mubr.f32.mxu0 %v196
  %481 = vmatmul.mubr.f32.gmra.mrb[0].mxu0 %v195
  %v482 = vpop.f32.mrb[0].mxu0
  %v483 = vadd.f32 0.0, %v482
  %v484 = vpop.f32.mrb[0].mxu0
  %485 = vdwg.mxu0
  %v486 = vadd.f32 %v197, %v328
  %v487 = vadd.f32 %v198, %v333
  %v488 = vadd.f32 %v199, %v338
  %v489 = vadd.f32 %v200, %v343
  %v490 = vadd.f32 %v201, %v348
  %v491 = vadd.f32 %v202, %v353
  %v492 = vadd.f32 %v203, %v358
  %v493 = vadd.f32 %v204, %v363
  %v494 = vadd.f32 %v205, %v368
  %v495 = vadd.f32 %v206, %v373
  %v496 = vadd.f32 %v207, %v378
  %v497 = vadd.f32 %v208, %v383
  %v498 = vadd.f32 %v209, %v388
  %v499 = vadd.f32 %v210, %v393
  %v500 = vadd.f32 %v211, %v398
  %v501 = vadd.f32 %v212, %v403
  %v502 = vadd.f32 %v213, %v408
  %v503 = vadd.f32 %v214, %v413
  %v504 = vadd.f32 %v215, %v418
  %v505 = vadd.f32 %v216, %v423
  %v506 = vadd.f32 %v217, %v428
  %v507 = vadd.f32 %v218, %v433
  %v508 = vadd.f32 %v219, %v438
  %v509 = vadd.f32 %v220, %v443
  %v510 = vadd.f32 %v221, %v448
  %v511 = vadd.f32 %v222, %v453
  %v512 = vadd.f32 %v223, %v458
  %v513 = vadd.f32 %v224, %v463
  %v514 = vadd.f32 %v225, %v468
  %v515 = vadd.f32 %v226, %v473
  %v516 = vadd.f32 %v227, %v478
  %v517 = vadd.f32 %v228, %v483
  %518 = vst [vmem:[#allocation2] sm:$0xff] %v486
  %519 = vst [vmem:[#allocation2 + $0x8] sm:$0xff] %v487
  %520 = vst [vmem:[#allocation2 + $0x10] sm:$0xff] %v488
  %521 = vst [vmem:[#allocation2 + $0x18] sm:$0xff] %v489
  %522 = vst [vmem:[#allocation2 + $0x20] sm:$0xff] %v490
  %523 = vst [vmem:[#allocation2 + $0x28] sm:$0xff] %v491
  %524 = vst [vmem:[#allocation2 + $0x30] sm:$0xff] %v492
  %525 = vst [vmem:[#allocation2 + $0x38] sm:$0xff] %v493
  %526 = vst [vmem:[#allocation2 + $0x40] sm:$0xff] %v494
  %527 = vst [vmem:[#allocation2 + $0x48] sm:$0xff] %v495
  %528 = vst [vmem:[#allocation2 + $0x50] sm:$0xff] %v496
  %529 = vst [vmem:[#allocation2 + $0x58] sm:$0xff] %v497
  %530 = vst [vmem:[#allocation2 + $0x60] sm:$0xff] %v498
  %531 = vst [vmem:[#allocation2 + $0x68] sm:$0xff] %v499
  %532 = vst [vmem:[#allocation2 + $0x70] sm:$0xff] %v500
  %533 = vst [vmem:[#allocation2 + $0x78] sm:$0xff] %v501
  %534 = vst [vmem:[#allocation2 + $0x80] sm:$0xff] %v502
  %535 = vst [vmem:[#allocation2 + $0x88] sm:$0xff] %v503
  %536 = vst [vmem:[#allocation2 + $0x90] sm:$0xff] %v504
  %537 = vst [vmem:[#allocation2 + $0x98] sm:$0xff] %v505
  %538 = vst [vmem:[#allocation2 + $0xa0] sm:$0xff] %v506
  %539 = vst [vmem:[#allocation2 + $0xa8] sm:$0xff] %v507
  %540 = vst [vmem:[#allocation2 + $0xb0] sm:$0xff] %v508
  %541 = vst [vmem:[#allocation2 + $0xb8] sm:$0xff] %v509
  %542 = vst [vmem:[#allocation2 + $0xc0] sm:$0xff] %v510
  %543 = vst [vmem:[#allocation2 + $0xc8] sm:$0xff] %v511
  %544 = vst [vmem:[#allocation2 + $0xd0] sm:$0xff] %v512
  %545 = vst [vmem:[#allocation2 + $0xd8] sm:$0xff] %v513
  %546 = vst [vmem:[#allocation2 + $0xe0] sm:$0xff] %v514
  %547 = vst [vmem:[#allocation2 + $0xe8] sm:$0xff] %v515
  %548 = vst [vmem:[#allocation2 + $0xf0] sm:$0xff] %v516
  %549 = vst [vmem:[#allocation2 + $0xf8] sm:$0xff] %v517
  // Predicated region
  $region22: #{sage_encoder_forward.2} parent=0 // pred_check
    %p550 = pneg %p17
  $region23: #{sage_encoder_forward.2} parent=0 // pred_check_branch
    %552 = sbr.rel (%p550) target = $region25
  $region24: #{sage_encoder_forward.2} parent=0 // pred_region
    %v553 = vld [vmem:[#allocation2] sm:$0xff]
    %v554 = vld [vmem:[#allocation2 + $0x8] sm:$0xff]
    %v555 = vld [vmem:[#allocation2 + $0x10] sm:$0xff]
    %v556 = vld [vmem:[#allocation2 + $0x18] sm:$0xff]
    %v557 = vld [vmem:[#allocation2 + $0x20] sm:$0xff]
    %v558 = vld [vmem:[#allocation2 + $0x28] sm:$0xff]
    %v559 = vld [vmem:[#allocation2 + $0x30] sm:$0xff]
    %v560 = vld [vmem:[#allocation2 + $0x38] sm:$0xff]
    %v561 = vld [vmem:[#allocation2 + $0x40] sm:$0xff]
    %v562 = vld [vmem:[#allocation2 + $0x48] sm:$0xff]
    %v563 = vld [vmem:[#allocation2 + $0x50] sm:$0xff]
    %v564 = vld [vmem:[#allocation2 + $0x58] sm:$0xff]
    %v565 = vld [vmem:[#allocation2 + $0x60] sm:$0xff]
    %v566 = vld [vmem:[#allocation2 + $0x68] sm:$0xff]
    %v567 = vld [vmem:[#allocation2 + $0x70] sm:$0xff]
    %v568 = vld [vmem:[#allocation2 + $0x78] sm:$0xff]
    %v569 = vld [vmem:[#allocation2 + $0x80] sm:$0xff]
    %v570 = vld [vmem:[#allocation2 + $0x88] sm:$0xff]
    %v571 = vld [vmem:[#allocation2 + $0x90] sm:$0xff]
    %v572 = vld [vmem:[#allocation2 + $0x98] sm:$0xff]
    %v573 = vld [vmem:[#allocation2 + $0xa0] sm:$0xff]
    %v574 = vld [vmem:[#allocation2 + $0xa8] sm:$0xff]
    %v575 = vld [vmem:[#allocation2 + $0xb0] sm:$0xff]
    %v576 = vld [vmem:[#allocation2 + $0xb8] sm:$0xff]
    %v577 = vld [vmem:[#allocation2 + $0xc0] sm:$0xff]
    %v578 = vld [vmem:[#allocation2 + $0xc8] sm:$0xff]
    %v579 = vld [vmem:[#allocation2 + $0xd0] sm:$0xff]
    %v580 = vld [vmem:[#allocation2 + $0xd8] sm:$0xff]
    %v581 = vld [vmem:[#allocation2 + $0xe0] sm:$0xff]
    %v582 = vld [vmem:[#allocation2 + $0xe8] sm:$0xff]
    %v583 = vld [vmem:[#allocation2 + $0xf0] sm:$0xff]
    %v584 = vld [vmem:[#allocation2 + $0xf8] sm:$0xff]
    %v585 = vld [vmem:[%s2] sm:$0xff]
    %v586 = vld [vmem:[%s2 + $0x8] sm:$0xff]
    %v587 = vld [vmem:[%s2 + $0x10] sm:$0xff]
    %v588 = vld [vmem:[%s2 + $0x18] sm:$0xff]
    %v589 = vld [vmem:[%s2 + $0x20] sm:$0xff]
    %v590 = vld [vmem:[%s2 + $0x28] sm:$0xff]
    %v591 = vld [vmem:[%s2 + $0x30] sm:$0xff]
    %v592 = vld [vmem:[%s2 + $0x38] sm:$0xff]
    %v593 = vld [vmem:[%s2 + $0x40] sm:$0xff]
    %v594 = vld [vmem:[%s2 + $0x48] sm:$0xff]
    %v595 = vld [vmem:[%s2 + $0x50] sm:$0xff]
    %v596 = vld [vmem:[%s2 + $0x58] sm:$0xff]
    %v597 = vld [vmem:[%s2 + $0x60] sm:$0xff]
    %v598 = vld [vmem:[%s2 + $0x68] sm:$0xff]
    %v599 = vld [vmem:[%s2 + $0x70] sm:$0xff]
    %v600 = vld [vmem:[%s2 + $0x78] sm:$0xff]
    %v601 = vld [vmem:[%s2 + $0x80] sm:$0xff]
    %v602 = vld [vmem:[%s2 + $0x88] sm:$0xff]
    %v603 = vld [vmem:[%s2 + $0x90] sm:$0xff]
    %v604 = vld [vmem:[%s2 + $0x98] sm:$0xff]
    %v605 = vld [vmem:[%s2 + $0xa0] sm:$0xff]
    %v606 = vld [vmem:[%s2 + $0xa8] sm:$0xff]
    %v607 = vld [vmem:[%s2 + $0xb0] sm:$0xff]
    %v608 = vld [vmem:[%s2 + $0xb8] sm:$0xff]
    %v609 = vld [vmem:[%s2 + $0xc0] sm:$0xff]
    %v610 = vld [vmem:[%s2 + $0xc8] sm:$0xff]
    %v611 = vld [vmem:[%s2 + $0xd0] sm:$0xff]
    %v612 = vld [vmem:[%s2 + $0xd8] sm:$0xff]
    %v613 = vld [vmem:[%s2 + $0xe0] sm:$0xff]
    %v614 = vld [vmem:[%s2 + $0xe8] sm:$0xff]
    %v615 = vld [vmem:[%s2 + $0xf0] sm:$0xff]
    %v616 = vld [vmem:[%s2 + $0xf8] sm:$0xff]
    %618 = vset.pattern.permute.xlu0 0
    %619 = vperm.xlu0 %618, %v585
    %v620 = vpop.permute.xlu0 %619
    %623 = vset.pattern.permute.xlu0 0
    %624 = vperm.xlu0 %623, %v586
    %v625 = vpop.permute.xlu0 %624
    %628 = vset.pattern.permute.xlu0 0
    %629 = vperm.xlu0 %628, %v587
    %v630 = vpop.permute.xlu0 %629
    %633 = vset.pattern.permute.xlu0 0
    %634 = vperm.xlu0 %633, %v588
    %v635 = vpop.permute.xlu0 %634
    %638 = vset.pattern.permute.xlu0 0
    %639 = vperm.xlu0 %638, %v589
    %v640 = vpop.permute.xlu0 %639
    %643 = vset.pattern.permute.xlu0 0
    %644 = vperm.xlu0 %643, %v590
    %v645 = vpop.permute.xlu0 %644
    %648 = vset.pattern.permute.xlu0 0
    %649 = vperm.xlu0 %648, %v591
    %v650 = vpop.permute.xlu0 %649
    %653 = vset.pattern.permute.xlu0 0
    %654 = vperm.xlu0 %653, %v592
    %v655 = vpop.permute.xlu0 %654
    %658 = vset.pattern.permute.xlu0 0
    %659 = vperm.xlu0 %658, %v593
    %v660 = vpop.permute.xlu0 %659
    %663 = vset.pattern.permute.xlu0 0
    %664 = vperm.xlu0 %663, %v594
    %v665 = vpop.permute.xlu0 %664
    %668 = vset.pattern.permute.xlu0 0
    %669 = vperm.xlu0 %668, %v595
    %v670 = vpop.permute.xlu0 %669
    %673 = vset.pattern.permute.xlu0 0
    %674 = vperm.xlu0 %673, %v596
    %v675 = vpop.permute.xlu0 %674
    %678 = vset.pattern.permute.xlu0 0
    %679 = vperm.xlu0 %678, %v597
    %v680 = vpop.permute.xlu0 %679
    %683 = vset.pattern.permute.xlu0 0
    %684 = vperm.xlu0 %683, %v598
    %v685 = vpop.permute.xlu0 %684
    %688 = vset.pattern.permute.xlu0 0
    %689 = vperm.xlu0 %688, %v599
    %v690 = vpop.permute.xlu0 %689
    %693 = vset.pattern.permute.xlu0 0
    %694 = vperm.xlu0 %693, %v600
    %v695 = vpop.permute.xlu0 %694
    %698 = vset.pattern.permute.xlu0 0
    %699 = vperm.xlu0 %698, %v601
    %v700 = vpop.permute.xlu0 %699
    %703 = vset.pattern.permute.xlu0 0
    %704 = vperm.xlu0 %703, %v602
    %v705 = vpop.permute.xlu0 %704
    %708 = vset.pattern.permute.xlu0 0
    %709 = vperm.xlu0 %708, %v603
    %v710 = vpop.permute.xlu0 %709
    %713 = vset.pattern.permute.xlu0 0
    %714 = vperm.xlu0 %713, %v604
    %v715 = vpop.permute.xlu0 %714
    %718 = vset.pattern.permute.xlu0 0
    %719 = vperm.xlu0 %718, %v605
    %v720 = vpop.permute.xlu0 %719
    %723 = vset.pattern.permute.xlu0 0
    %724 = vperm.xlu0 %723, %v606
    %v725 = vpop.permute.xlu0 %724
    %728 = vset.pattern.permute.xlu0 0
    %729 = vperm.xlu0 %728, %v607
    %v730 = vpop.permute.xlu0 %729
    %733 = vset.pattern.permute.xlu0 0
    %734 = vperm.xlu0 %733, %v608
    %v735 = vpop.permute.xlu0 %734
    %738 = vset.pattern.permute.xlu0 0
    %739 = vperm.xlu0 %738, %v609
    %v740 = vpop.permute.xlu0 %739
    %743 = vset.pattern.permute.xlu0 0
    %744 = vperm.xlu0 %743, %v610
    %v745 = vpop.permute.xlu0 %744
    %748 = vset.pattern.permute.xlu0 0
    %749 = vperm.xlu0 %748, %v611
    %v750 = vpop.permute.xlu0 %749
    %753 = vset.pattern.permute.xlu0 0
    %754 = vperm.xlu0 %753, %v612
    %v755 = vpop.permute.xlu0 %754
    %758 = vset.pattern.permute.xlu0 0
    %759 = vperm.xlu0 %758, %v613
    %v760 = vpop.permute.xlu0 %759
    %763 = vset.pattern.permute.xlu0 0
    %764 = vperm.xlu0 %763, %v614
    %v765 = vpop.permute.xlu0 %764
    %768 = vset.pattern.permute.xlu0 0
    %769 = vperm.xlu0 %768, %v615
    %v770 = vpop.permute.xlu0 %769
    %773 = vset.pattern.permute.xlu0 0
    %774 = vperm.xlu0 %773, %v616
    %v775 = vpop.permute.xlu0 %774
    %v777 = vmul.f32 %v553, %v620
    %v778 = vmul.f32 %v554, %v625
    %v779 = vmul.f32 %v555, %v630
    %v780 = vmul.f32 %v556, %v635
    %v781 = vmul.f32 %v557, %v640
    %v782 = vmul.f32 %v558, %v645
    %v783 = vmul.f32 %v559, %v650
    %v784 = vmul.f32 %v560, %v655
    %v785 = vmul.f32 %v561, %v660
    %v786 = vmul.f32 %v562, %v665
    %v787 = vmul.f32 %v563, %v670
    %v788 = vmul.f32 %v564, %v675
    %v789 = vmul.f32 %v565, %v680
    %v790 = vmul.f32 %v566, %v685
    %v791 = vmul.f32 %v567, %v690
    %v792 = vmul.f32 %v568, %v695
    %v793 = vmul.f32 %v569, %v700
    %v794 = vmul.f32 %v570, %v705
    %v795 = vmul.f32 %v571, %v710
    %v796 = vmul.f32 %v572, %v715
    %v797 = vmul.f32 %v573, %v720
    %v798 = vmul.f32 %v574, %v725
    %v799 = vmul.f32 %v575, %v730
    %v800 = vmul.f32 %v576, %v735
    %v801 = vmul.f32 %v577, %v740
    %v802 = vmul.f32 %v578, %v745
    %v803 = vmul.f32 %v579, %v750
    %v804 = vmul.f32 %v580, %v755
    %v805 = vmul.f32 %v581, %v760
    %v806 = vmul.f32 %v582, %v765
    %v807 = vmul.f32 %v583, %v770
    %v808 = vmul.f32 %v584, %v775
    %v809 = vld [vmem:[%s3] sm:$0xff]
    %v810 = vld [vmem:[%s3 + $0x8] sm:$0xff]
    %v811 = vld [vmem:[%s3 + $0x10] sm:$0xff]
    %v812 = vld [vmem:[%s3 + $0x18] sm:$0xff]
    %v813 = vld [vmem:[%s3 + $0x20] sm:$0xff]
    %v814 = vld [vmem:[%s3 + $0x28] sm:$0xff]
    %v815 = vld [vmem:[%s3 + $0x30] sm:$0xff]
    %v816 = vld [vmem:[%s3 + $0x38] sm:$0xff]
    %v817 = vld [vmem:[%s3 + $0x40] sm:$0xff]
    %v818 = vld [vmem:[%s3 + $0x48] sm:$0xff]
    %v819 = vld [vmem:[%s3 + $0x50] sm:$0xff]
    %v820 = vld [vmem:[%s3 + $0x58] sm:$0xff]
    %v821 = vld [vmem:[%s3 + $0x60] sm:$0xff]
    %v822 = vld [vmem:[%s3 + $0x68] sm:$0xff]
    %v823 = vld [vmem:[%s3 + $0x70] sm:$0xff]
    %v824 = vld [vmem:[%s3 + $0x78] sm:$0xff]
    %v825 = vld [vmem:[%s3 + $0x80] sm:$0xff]
    %v826 = vld [vmem:[%s3 + $0x88] sm:$0xff]
    %v827 = vld [vmem:[%s3 + $0x90] sm:$0xff]
    %v828 = vld [vmem:[%s3 + $0x98] sm:$0xff]
    %v829 = vld [vmem:[%s3 + $0xa0] sm:$0xff]
    %v830 = vld [vmem:[%s3 + $0xa8] sm:$0xff]
    %v831 = vld [vmem:[%s3 + $0xb0] sm:$0xff]
    %v832 = vld [vmem:[%s3 + $0xb8] sm:$0xff]
    %v833 = vld [vmem:[%s3 + $0xc0] sm:$0xff]
    %v834 = vld [vmem:[%s3 + $0xc8] sm:$0xff]
    %v835 = vld [vmem:[%s3 + $0xd0] sm:$0xff]
    %v836 = vld [vmem:[%s3 + $0xd8] sm:$0xff]
    %v837 = vld [vmem:[%s3 + $0xe0] sm:$0xff]
    %v838 = vld [vmem:[%s3 + $0xe8] sm:$0xff]
    %v839 = vld [vmem:[%s3 + $0xf0] sm:$0xff]
    %v840 = vld [vmem:[%s3 + $0xf8] sm:$0xff]
    %v841 = vadd.f32 %v777, %v809
    %v842 = vadd.f32 %v778, %v810
    %v843 = vadd.f32 %v779, %v811
    %v844 = vadd.f32 %v780, %v812
    %v845 = vadd.f32 %v781, %v813
    %v846 = vadd.f32 %v782, %v814
    %v847 = vadd.f32 %v783, %v815
    %v848 = vadd.f32 %v784, %v816
    %v849 = vadd.f32 %v785, %v817
    %v850 = vadd.f32 %v786, %v818
    %v851 = vadd.f32 %v787, %v819
    %v852 = vadd.f32 %v788, %v820
    %v853 = vadd.f32 %v789, %v821
    %v854 = vadd.f32 %v790, %v822
    %v855 = vadd.f32 %v791, %v823
    %v856 = vadd.f32 %v792, %v824
    %v857 = vadd.f32 %v793, %v825
    %v858 = vadd.f32 %v794, %v826
    %v859 = vadd.f32 %v795, %v827
    %v860 = vadd.f32 %v796, %v828
    %v861 = vadd.f32 %v797, %v829
    %v862 = vadd.f32 %v798, %v830
    %v863 = vadd.f32 %v799, %v831
    %v864 = vadd.f32 %v800, %v832
    %v865 = vadd.f32 %v801, %v833
    %v866 = vadd.f32 %v802, %v834
    %v867 = vadd.f32 %v803, %v835
    %v868 = vadd.f32 %v804, %v836
    %v869 = vadd.f32 %v805, %v837
    %v870 = vadd.f32 %v806, %v838
    %v871 = vadd.f32 %v807, %v839
    %v872 = vadd.f32 %v808, %v840
    %v873 = vmul.f32 %v841, %v841
    %v874 = vmul.f32 %v842, %v842
    %v875 = vmul.f32 %v843, %v843
    %v876 = vmul.f32 %v844, %v844
    %v877 = vmul.f32 %v845, %v845
    %v878 = vmul.f32 %v846, %v846
    %v879 = vmul.f32 %v847, %v847
    %v880 = vmul.f32 %v848, %v848
    %v881 = vmul.f32 %v849, %v849
    %v882 = vmul.f32 %v850, %v850
    %v883 = vmul.f32 %v851, %v851
    %v884 = vmul.f32 %v852, %v852
    %v885 = vmul.f32 %v853, %v853
    %v886 = vmul.f32 %v854, %v854
    %v887 = vmul.f32 %v855, %v855
    %v888 = vmul.f32 %v856, %v856
    %v889 = vmul.f32 %v857, %v857
    %v890 = vmul.f32 %v858, %v858
    %v891 = vmul.f32 %v859, %v859
    %v892 = vmul.f32 %v860, %v860
    %v893 = vmul.f32 %v861, %v861
    %v894 = vmul.f32 %v862, %v862
    %v895 = vmul.f32 %v863, %v863
    %v896 = vmul.f32 %v864, %v864
    %v897 = vmul.f32 %v865, %v865
    %v898 = vmul.f32 %v866, %v866
    %v899 = vmul.f32 %v867, %v867
    %v900 = vmul.f32 %v868, %v868
    %v901 = vmul.f32 %v869, %v869
    %v902 = vmul.f32 %v870, %v870
    %v903 = vmul.f32 %v871, %v871
    %v904 = vmul.f32 %v872, %v872
    %905 = vadd.xlane.f32.xlu0 %v873
    %v906 = vpop.xlane.xlu0 %905
    %907 = vadd.xlane.f32.xlu0 %v874
    %v908 = vpop.xlane.xlu0 %907
    %909 = vadd.xlane.f32.xlu0 %v875
    %v910 = vpop.xlane.xlu0 %909
    %911 = vadd.xlane.f32.xlu0 %v876
    %v912 = vpop.xlane.xlu0 %911
    %913 = vadd.xlane.f32.xlu0 %v877
    %v914 = vpop.xlane.xlu0 %913
    %915 = vadd.xlane.f32.xlu0 %v878
    %v916 = vpop.xlane.xlu0 %915
    %917 = vadd.xlane.f32.xlu0 %v879
    %v918 = vpop.xlane.xlu0 %917
    %919 = vadd.xlane.f32.xlu0 %v880
    %v920 = vpop.xlane.xlu0 %919
    %921 = vadd.xlane.f32.xlu0 %v881
    %v922 = vpop.xlane.xlu0 %921
    %923 = vadd.xlane.f32.xlu0 %v882
    %v924 = vpop.xlane.xlu0 %923
    %925 = vadd.xlane.f32.xlu0 %v883
    %v926 = vpop.xlane.xlu0 %925
    %927 = vadd.xlane.f32.xlu0 %v884
    %v928 = vpop.xlane.xlu0 %927
    %929 = vadd.xlane.f32.xlu0 %v885
    %v930 = vpop.xlane.xlu0 %929
    %931 = vadd.xlane.f32.xlu0 %v886
    %v932 = vpop.xlane.xlu0 %931
    %933 = vadd.xlane.f32.xlu0 %v887
    %v934 = vpop.xlane.xlu0 %933
    %935 = vadd.xlane.f32.xlu0 %v888
    %v936 = vpop.xlane.xlu0 %935
    %937 = vadd.xlane.f32.xlu0 %v889
    %v938 = vpop.xlane.xlu0 %937
    %939 = vadd.xlane.f32.xlu0 %v890
    %v940 = vpop.xlane.xlu0 %939
    %941 = vadd.xlane.f32.xlu0 %v891
    %v942 = vpop.xlane.xlu0 %941
    %943 = vadd.xlane.f32.xlu0 %v892
    %v944 = vpop.xlane.xlu0 %943
    %945 = vadd.xlane.f32.xlu0 %v893
    %v946 = vpop.xlane.xlu0 %945
    %947 = vadd.xlane.f32.xlu0 %v894
    %v948 = vpop.xlane.xlu0 %947
    %949 = vadd.xlane.f32.xlu0 %v895
    %v950 = vpop.xlane.xlu0 %949
    %951 = vadd.xlane.f32.xlu0 %v896
    %v952 = vpop.xlane.xlu0 %951
    %953 = vadd.xlane.f32.xlu0 %v897
    %v954 = vpop.xlane.xlu0 %953
    %955 = vadd.xlane.f32.xlu0 %v898
    %v956 = vpop.xlane.xlu0 %955
    %957 = vadd.xlane.f32.xlu0 %v899
    %v958 = vpop.xlane.xlu0 %957
    %959 = vadd.xlane.f32.xlu0 %v900
    %v960 = vpop.xlane.xlu0 %959
    %961 = vadd.xlane.f32.xlu0 %v901
    %v962 = vpop.xlane.xlu0 %961
    %963 = vadd.xlane.f32.xlu0 %v902
    %v964 = vpop.xlane.xlu0 %963
    %965 = vadd.xlane.f32.xlu0 %v903
    %v966 = vpop.xlane.xlu0 %965
    %967 = vadd.xlane.f32.xlu0 %v904
    %v968 = vpop.xlane.xlu0 %967
    %v969 = vmax.f32 %v906, 1e-24
    %v970 = vmax.f32 %v908, 1e-24
    %v971 = vmax.f32 %v910, 1e-24
    %v972 = vmax.f32 %v912, 1e-24
    %v973 = vmax.f32 %v914, 1e-24
    %v974 = vmax.f32 %v916, 1e-24
    %v975 = vmax.f32 %v918, 1e-24
    %v976 = vmax.f32 %v920, 1e-24
    %v977 = vmax.f32 %v922, 1e-24
    %v978 = vmax.f32 %v924, 1e-24
    %v979 = vmax.f32 %v926, 1e-24
    %v980 = vmax.f32 %v928, 1e-24
    %v981 = vmax.f32 %v930, 1e-24
    %v982 = vmax.f32 %v932, 1e-24
    %v983 = vmax.f32 %v934, 1e-24
    %v984 = vmax.f32 %v936, 1e-24
    %v985 = vmax.f32 %v938, 1e-24
    %v986 = vmax.f32 %v940, 1e-24
    %v987 = vmax.f32 %v942, 1e-24
    %v988 = vmax.f32 %v944, 1e-24
    %v989 = vmax.f32 %v946, 1e-24
    %v990 = vmax.f32 %v948, 1e-24
    %v991 = vmax.f32 %v950, 1e-24
    %v992 = vmax.f32 %v952, 1e-24
    %v993 = vmax.f32 %v954, 1e-24
    %v994 = vmax.f32 %v956, 1e-24
    %v995 = vmax.f32 %v958, 1e-24
    %v996 = vmax.f32 %v960, 1e-24
    %v997 = vmax.f32 %v962, 1e-24
    %v998 = vmax.f32 %v964, 1e-24
    %v999 = vmax.f32 %v966, 1e-24
    %v1000 = vmax.f32 %v968, 1e-24
    %v1001 = vrsqrt.pop %v969
    %v1002 = vrsqrt.pop %v970
    %v1003 = vrsqrt.pop %v971
    %v1004 = vrsqrt.pop %v972
    %v1005 = vrsqrt.pop %v973
    %v1006 = vrsqrt.pop %v974
    %v1007 = vrsqrt.pop %v975
    %v1008 = vrsqrt.pop %v976
    %v1009 = vrsqrt.pop %v977
    %v1010 = vrsqrt.pop %v978
    %v1011 = vrsqrt.pop %v979
    %v1012 = vrsqrt.pop %v980
    %v1013 = vrsqrt.pop %v981
    %v1014 = vrsqrt.pop %v982
    %v1015 = vrsqrt.pop %v983
    %v1016 = vrsqrt.pop %v984
    %v1017 = vrsqrt.pop %v985
    %v1018 = vrsqrt.pop %v986
    %v1019 = vrsqrt.pop %v987
    %v1020 = vrsqrt.pop %v988
    %v1021 = vrsqrt.pop %v989
    %v1022 = vrsqrt.pop %v990
    %v1023 = vrsqrt.pop %v991
    %v1024 = vrsqrt.pop %v992
    %v1025 = vrsqrt.pop %v993
    %v1026 = vrsqrt.pop %v994
    %v1027 = vrsqrt.pop %v995
    %v1028 = vrsqrt.pop %v996
    %v1029 = vrsqrt.pop %v997
    %v1030 = vrsqrt.pop %v998
    %v1031 = vrsqrt.pop %v999
    %v1032 = vrsqrt.pop %v1000
    %v1033 = vmul.f32 %v841, %v1001
    %v1034 = vmul.f32 %v842, %v1002
    %v1035 = vmul.f32 %v843, %v1003
    %v1036 = vmul.f32 %v844, %v1004
    %v1037 = vmul.f32 %v845, %v1005
    %v1038 = vmul.f32 %v846, %v1006
    %v1039 = vmul.f32 %v847, %v1007
    %v1040 = vmul.f32 %v848, %v1008
    %v1041 = vmul.f32 %v849, %v1009
    %v1042 = vmul.f32 %v850, %v1010
    %v1043 = vmul.f32 %v851, %v1011
    %v1044 = vmul.f32 %v852, %v1012
    %v1045 = vmul.f32 %v853, %v1013
    %v1046 = vmul.f32 %v854, %v1014
    %v1047 = vmul.f32 %v855, %v1015
    %v1048 = vmul.f32 %v856, %v1016
    %v1049 = vmul.f32 %v857, %v1017
    %v1050 = vmul.f32 %v858, %v1018
    %v1051 = vmul.f32 %v859, %v1019
    %v1052 = vmul.f32 %v860, %v1020
    %v1053 = vmul.f32 %v861, %v1021
    %v1054 = vmul.f32 %v862, %v1022
    %v1055 = vmul.f32 %v863, %v1023
    %v1056 = vmul.f32 %v864, %v1024
    %v1057 = vmul.f32 %v865, %v1025
    %v1058 = vmul.f32 %v866, %v1026
    %v1059 = vmul.f32 %v867, %v1027
    %v1060 = vmul.f32 %v868, %v1028
    %v1061 = vmul.f32 %v869, %v1029
    %v1062 = vmul.f32 %v870, %v1030
    %v1063 = vmul.f32 %v871, %v1031
    %v1064 = vmul.f32 %v872, %v1032
    %v1065 = vmax.f32 %v1033, 0.0
    %v1066 = vmax.f32 %v1034, 0.0
    %v1067 = vmax.f32 %v1035, 0.0
    %v1068 = vmax.f32 %v1036, 0.0
    %v1069 = vmax.f32 %v1037, 0.0
    %v1070 = vmax.f32 %v1038, 0.0
    %v1071 = vmax.f32 %v1039, 0.0
    %v1072 = vmax.f32 %v1040, 0.0
    %v1073 = vmax.f32 %v1041, 0.0
    %v1074 = vmax.f32 %v1042, 0.0
    %v1075 = vmax.f32 %v1043, 0.0
    %v1076 = vmax.f32 %v1044, 0.0
    %v1077 = vmax.f32 %v1045, 0.0
    %v1078 = vmax.f32 %v1046, 0.0
    %v1079 = vmax.f32 %v1047, 0.0
    %v1080 = vmax.f32 %v1048, 0.0
    %v1081 = vmax.f32 %v1049, 0.0
    %v1082 = vmax.f32 %v1050, 0.0
    %v1083 = vmax.f32 %v1051, 0.0
    %v1084 = vmax.f32 %v1052, 0.0
    %v1085 = vmax.f32 %v1053, 0.0
    %v1086 = vmax.f32 %v1054, 0.0
    %v1087 = vmax.f32 %v1055, 0.0
    %v1088 = vmax.f32 %v1056, 0.0
    %v1089 = vmax.f32 %v1057, 0.0
    %v1090 = vmax.f32 %v1058, 0.0
    %v1091 = vmax.f32 %v1059, 0.0
    %v1092 = vmax.f32 %v1060, 0.0
    %v1093 = vmax.f32 %v1061, 0.0
    %v1094 = vmax.f32 %v1062, 0.0
    %v1095 = vmax.f32 %v1063, 0.0
    %v1096 = vmax.f32 %v1064, 0.0
    %1097 = vst [vmem:[%s4] sm:$0xff] %v1065
    %1098 = vst [vmem:[%s4 + $0x8] sm:$0xff] %v1066
    %1099 = vst [vmem:[%s4 + $0x10] sm:$0xff] %v1067
    %1100 = vst [vmem:[%s4 + $0x18] sm:$0xff] %v1068
    %1101 = vst [vmem:[%s4 + $0x20] sm:$0xff] %v1069
    %1102 = vst [vmem:[%s4 + $0x28] sm:$0xff] %v1070
    %1103 = vst [vmem:[%s4 + $0x30] sm:$0xff] %v1071
    %1104 = vst [vmem:[%s4 + $0x38] sm:$0xff] %v1072
    %1105 = vst [vmem:[%s4 + $0x40] sm:$0xff] %v1073
    %1106 = vst [vmem:[%s4 + $0x48] sm:$0xff] %v1074
    %1107 = vst [vmem:[%s4 + $0x50] sm:$0xff] %v1075
    %1108 = vst [vmem:[%s4 + $0x58] sm:$0xff] %v1076
    %1109 = vst [vmem:[%s4 + $0x60] sm:$0xff] %v1077
    %1110 = vst [vmem:[%s4 + $0x68] sm:$0xff] %v1078
    %1111 = vst [vmem:[%s4 + $0x70] sm:$0xff] %v1079
    %1112 = vst [vmem:[%s4 + $0x78] sm:$0xff] %v1080
    %1113 = vst [vmem:[%s4 + $0x80] sm:$0xff] %v1081
    %1114 = vst [vmem:[%s4 + $0x88] sm:$0xff] %v1082
    %1115 = vst [vmem:[%s4 + $0x90] sm:$0xff] %v1083
    %1116 = vst [vmem:[%s4 + $0x98] sm:$0xff] %v1084
    %1117 = vst [vmem:[%s4 + $0xa0] sm:$0xff] %v1085
    %1118 = vst [vmem:[%s4 + $0xa8] sm:$0xff] %v1086
    %1119 = vst [vmem:[%s4 + $0xb0] sm:$0xff] %v1087
    %1120 = vst [vmem:[%s4 + $0xb8] sm:$0xff] %v1088
    %1121 = vst [vmem:[%s4 + $0xc0] sm:$0xff] %v1089
    %1122 = vst [vmem:[%s4 + $0xc8] sm:$0xff] %v1090
    %1123 = vst [vmem:[%s4 + $0xd0] sm:$0xff] %v1091
    %1124 = vst [vmem:[%s4 + $0xd8] sm:$0xff] %v1092
    %1125 = vst [vmem:[%s4 + $0xe0] sm:$0xff] %v1093
    %1126 = vst [vmem:[%s4 + $0xe8] sm:$0xff] %v1094
    %1127 = vst [vmem:[%s4 + $0xf0] sm:$0xff] %v1095
    %1128 = vst [vmem:[%s4 + $0xf8] sm:$0xff] %v1096
  $region25: #{sage_encoder_forward.2} parent=0 // pred_fallthru
    _
  // Predicated region
  $region26: #{sage_encoder_forward.2} parent=0 // pred_check
    _
  $region27: #{sage_encoder_forward.2} parent=0 // pred_check_branch
    %1130 = sbr.rel (0) target = $region29
  $region28: #{sage_encoder_forward.2} parent=0 // pred_region
    _
  $region29: #{sage_encoder_forward.2} parent=0 // pred_fallthru
    _
  // Predicated region
  $region30: #{sage_encoder_forward.2} parent=0 // pred_check
    _
  $region31: #{sage_encoder_forward.2} parent=0 // pred_check_branch
    %1132 = sbr.rel (0) target = $region33
  $region32: #{sage_encoder_forward.2} parent=0 // pred_region
    _
  $region33: #{sage_encoder_forward.2} parent=0 // pred_fallthru
    _

</llo_original>
